<compile_context>
chip_gen: v6e
topology: v6e:2x2x1
jax: 0.10.0
libtpu: 0.0.40
codegen_flags: <defaults>
</compile_context>

<pallas_src>
import functools

import jax
import jax.numpy as jnp
from jax.experimental import pallas as pl
from jax.experimental.pallas import tpu as pltpu

BN_EPS = 1e-5
MATMUL_DTYPE = jnp.bfloat16   # MXU operand dtype
ACT_DTYPE = jnp.bfloat16      # inter-layer activation dtype
LANE = 128


# --------------------------------------------------------------------------------------
# small helpers
# --------------------------------------------------------------------------------------
def _round_up(x, m):
    return (x + m - 1) // m * m


def _pad_last(x, target, value=0.0):
    pad = target - x.shape[-1]
    if pad == 0:
        return x
    widths = [(0, 0)] * (x.ndim - 1) + [(0, pad)]
    return jnp.pad(x, widths, constant_values=value)


def _vmem_limit(block_bytes):
    """Generation-aware VMEM limit derived from the actual block footprint."""
    try:
        cap = int(pltpu.get_tpu_info().vmem_capacity_bytes)
    except Exception:
        cap = 64 * 1024 * 1024
    want = int(block_bytes) + (4 << 20)
    return int(min(max(want, 16 << 20), cap * 3 // 4))


def _divisor_tile(n, target, multiple=8):
    """Largest divisor of n that is <= target and a multiple of `multiple`; else n (full)."""
    if n <= target:
        return n
    cap = (target // multiple) * multiple
    for cand in range(cap, 0, -multiple):
        if n % cand == 0:
            return cand
    return n


def _k_tile(d, target=2048):
    """Contraction tile: prefer multiples of 256 (full 256x256 MXU passes), then 128."""
    if d <= target:
        return d
    for mult in (256, 128):
        cap = (target // mult) * mult
        for cand in range(cap, 0, -mult):
            if d % cand == 0:
                return cand
    return d


def _batch_tile(b, t, target_rows=1024):
    """Largest divisor of b with roughly target_rows = tb * t rows per tile."""
    per = max(1, target_rows // max(t, 1))
    for cand in range(min(b, per), 0, -1):
        if b % cand == 0:
            return cand
    return 1


def _hash_u32(x):
    """Cheap stateless 32-bit mix (splitmix-style) on uint32 arrays."""
    x = x ^ (x >> 16)
    x = x * jnp.uint32(0x7FEB352D)
    x = x ^ (x >> 15)
    x = x * jnp.uint32(0x846CA68B)
    x = x ^ (x >> 16)
    return x


# --------------------------------------------------------------------------------------
# Kernel 1a: Conv1d (tap-streamed) GEMM + per-tile BN partial stats
# --------------------------------------------------------------------------------------
def _conv_gemm_stats_kernel(x_ref, w_ref, y_ref, st_ref, *, ktaps, t_out, merge_rows):
    # x_ref : (tb, Tp, Cp) bf16   (Tp = T + K - 1 halo included; read from HBM once)
    # w_ref : (K, Cp, Op)  bf16   (whole conv weight, resident)
    # y_ref : (tb, T, Op)  bf16   pre-BN conv output
    # st_ref: (1, 2, Op)   f32    [per-tile sum ; per-tile M2 about the tile mean]
    tb, _, cp = x_ref.shape
    op = w_ref.shape[2]
    n_rows = tb * t_out
    inv_n = 1.0 / n_rows

    if merge_rows:
        # T is a full-sublane multiple: merge (tb, T) rows -> one tall GEMM per tap.
        acc = jnp.zeros((n_rows, op), jnp.float32)
        for tap in range(ktaps):
            xs = x_ref[:, tap:tap + t_out, :].reshape(n_rows, cp)
            acc = acc + jnp.dot(xs, w_ref[tap], preferred_element_type=jnp.float32)
        y_ref[...] = acc.reshape(tb, t_out, op).astype(y_ref.dtype)
        s1 = jnp.sum(acc, axis=0, keepdims=True)
        d = acc - s1 * inv_n
        m2 = jnp.sum(d * d, axis=0, keepdims=True)
    else:
        # TODO(synk): when T is not sublane-aligned we avoid an unaligned in-kernel reshape
        # and fall back to per-sample 2-D matmuls (M = T) - lower MXU row utilization.
        per_b = []
        s1 = jnp.zeros((1, op), jnp.float32)
        for b in range(tb):
            acc_b = jnp.zeros((t_out, op), jnp.float32)
            for tap in range(ktaps):
                acc_b = acc_b + jnp.dot(x_ref[b, tap:tap + t_out, :], w_ref[tap],
                                        preferred_element_type=jnp.float32)
            per_b.append(acc_b)
            y_ref[b] = acc_b.astype(y_ref.dtype)
            s1 = s1 + jnp.sum(acc_b, axis=0, keepdims=True)
        mean_t = s1 * inv_n
        m2 = jnp.zeros((1, op), jnp.float32)
        for acc_b in per_b:
            d = acc_b - mean_t
            m2 = m2 + jnp.sum(d * d, axis=0, keepdims=True)

    st_ref[0, 0:1, :] = s1
    st_ref[0, 1:2, :] = m2


def conv_gemm_stats(x_pad, w_p):
    """x_pad: (B, Tp, Cp) bf16, Tp = T + K - 1; w_p: (K, Cp, Op) bf16.
    Returns y (B, T, Op) bf16, partial stats (n_tiles, 2, Op) f32, rows-per-tile."""
    bsz, tp, cp = x_pad.shape
    ktaps, cw, op = w_p.shape
    assert cw == cp
    t_out = tp - (ktaps - 1)
    tb = _batch_tile(bsz, t_out)
    nbt = bsz // tb
    merge = (t_out % 16 == 0)   # safe for both f32 (8) and packed bf16 (16) sublane tiles

    kern = functools.partial(_conv_gemm_stats_kernel,
                             ktaps=ktaps, t_out=t_out, merge_rows=merge)
    block_bytes = (2 * (tb * tp * cp * 2 + ktaps * cp * op * 2 + tb * t_out * op * 2
                        + 2 * op * 4)
                   + 3 * tb * t_out * op * 4)

    y, stats = pl.pallas_call(
        kern,
        out_shape=(jax.ShapeDtypeStruct((bsz, t_out, op), ACT_DTYPE),
                   jax.ShapeDtypeStruct((nbt, 2, op), jnp.float32)),
        grid_spec=pltpu.PrefetchScalarGridSpec(
            num_scalar_prefetch=0,
            grid=(nbt,),
            in_specs=[pl.BlockSpec((tb, tp, cp), lambda i: (i, 0, 0)),
                      pl.BlockSpec((ktaps, cp, op), lambda i: (0, 0, 0))],
            out_specs=[pl.BlockSpec((tb, t_out, op), lambda i: (i, 0, 0)),
                       pl.BlockSpec((1, 2, op), lambda i: (i, 0, 0))]),
        compiler_params=pltpu.CompilerParams(
            dimension_semantics=("parallel",),
            vmem_limit_bytes=_vmem_limit(block_bytes)),
    )(x_pad, w_p)
    return y, stats, tb * t_out


# --------------------------------------------------------------------------------------
# Kernel 1b: Dense GEMM (row-tiled, K-streamed) + per-tile BN partial stats
# --------------------------------------------------------------------------------------
def _dense_gemm_stats_kernel(x_ref, w_ref, y_ref, st_ref, acc_ref, *, rows_per_tile):
    k = pl.program_id(1)

    @pl.when(k == 0)
    def _():
        acc_ref[...] = jnp.zeros_like(acc_ref)

    acc_ref[...] += jnp.dot(x_ref[...], w_ref[...], preferred_element_type=jnp.float32)

    @pl.when(k == pl.num_programs(1) - 1)
    def _():
        acc = acc_ref[...]
        y_ref[...] = acc.astype(y_ref.dtype)
        s1 = jnp.sum(acc, axis=0, keepdims=True)
        d = acc - s1 * (1.0 / rows_per_tile)
        m2 = jnp.sum(d * d, axis=0, keepdims=True)
        st_ref[0, 0:1, :] = s1
        st_ref[0, 1:2, :] = m2


def dense_gemm_stats(x2d, w_p):
    """x2d: (N, D) bf16; w_p: (D, Op) bf16 -> y (N, Op) bf16, stats (n_tiles, 2, Op) f32."""
    n, d = x2d.shape
    dw, op = w_p.shape
    assert dw == d
    tn = _divisor_tile(n, 512, multiple=8)
    tk = _k_tile(d, 2048)
    nrt, nkt = n // tn, d // tk

    kern = functools.partial(_dense_gemm_stats_kernel, rows_per_tile=tn)
    block_bytes = (2 * (tn * tk * 2 + tk * op * 2 + tn * op * 2 + 2 * op * 4)
                   + 3 * tn * op * 4)

    y, stats = pl.pallas_call(
        kern,
        out_shape=(jax.ShapeDtypeStruct((n, op), ACT_DTYPE),
                   jax.ShapeDtypeStruct((nrt, 2, op), jnp.float32)),
        grid_spec=pltpu.PrefetchScalarGridSpec(
            num_scalar_prefetch=0,
            grid=(nrt, nkt),
            in_specs=[pl.BlockSpec((tn, tk), lambda i, k: (i, k)),
                      pl.BlockSpec((tk, op), lambda i, k: (k, 0))],
            out_specs=[pl.BlockSpec((tn, op), lambda i, k: (i, 0)),
                       pl.BlockSpec((1, 2, op), lambda i, k: (i, 0, 0))],
            scratch_shapes=[pltpu.VMEM((tn, op), jnp.float32)]),
        compiler_params=pltpu.CompilerParams(
            dimension_semantics=("parallel", "arbitrary"),
            vmem_limit_bytes=_vmem_limit(block_bytes)),
    )(x2d, w_p)
    return y, stats, tn


# --------------------------------------------------------------------------------------
# Kernel 2: fused elementwise BatchNorm (scale/shift) + ReLU + inverted dropout
# --------------------------------------------------------------------------------------
def _bn_act_dropout_kernel(seed_ref, y_ref, a_ref, c_ref, o_ref, *,
                           apply_relu, drop_p, training, total_cols, tile_rows):
    y = y_ref[...].astype(jnp.float32)
    y = y * a_ref[...] + c_ref[...]
    if apply_relu:
        y = jnp.maximum(y, 0.0)
    if training and drop_p > 0.0:
        row0 = (pl.program_id(0) * tile_rows).astype(jnp.uint32)
        rows = jax.lax.broadcasted_iota(jnp.int32, y.shape, 0).astype(jnp.uint32) + row0
        cols = jax.lax.broadcasted_iota(jnp.int32, y.shape, 1).astype(jnp.uint32)
        idx = rows * jnp.uint32(total_cols) + cols
        seed_u = seed_ref[0].astype(jnp.uint32)
        bits = _hash_u32(idx * jnp.uint32(0x9E3779B9) + seed_u)
        bits31 = (bits >> 1).astype(jnp.int32)
        thresh = jnp.int32(min(int(round(drop_p * (1 << 31))), (1 << 31) - 1))
        keep = bits31 >= thresh
        y = jnp.where(keep, y * jnp.float32(1.0 / (1.0 - drop_p)), 0.0)
    o_ref[...] = y.astype(o_ref.dtype)


def bn_relu_dropout(y2d, a, c, seed, *, drop_p, training, apply_relu=True):
    """y2d: (N, H) bf16; a,c: (1, H) f32 (folded BN scale/shift). Returns (N, H) bf16."""
    n, h = y2d.shape
    tr = _divisor_tile(n, 1024, multiple=8)
    nrt = n // tr

    kern = functools.partial(_bn_act_dropout_kernel, apply_relu=bool(apply_relu),
                             drop_p=float(drop_p), training=bool(training),
                             total_cols=h, tile_rows=tr)
    seed_arr = jnp.asarray([seed], dtype=jnp.int32)
    block_bytes = 2 * (2 * tr * h * 2 + 2 * h * 4) + 4 * tr * h * 4

    return pl.pallas_call(
        kern,
        out_shape=jax.ShapeDtypeStruct((n, h), ACT_DTYPE),
        grid_spec=pltpu.PrefetchScalarGridSpec(
            num_scalar_prefetch=1,                       # seed -> SMEM
            grid=(nrt,),
            in_specs=[pl.BlockSpec((tr, h), lambda i, s: (i, 0)),
                      pl.BlockSpec((1, h), lambda i, s: (0, 0)),
                      pl.BlockSpec((1, h), lambda i, s: (0, 0))],
            out_specs=pl.BlockSpec((tr, h), lambda i, s: (i, 0))),
        compiler_params=pltpu.CompilerParams(
            dimension_semantics=("parallel",),
            vmem_limit_bytes=_vmem_limit(block_bytes)),
    )(seed_arr, y2d, a, c)


# --------------------------------------------------------------------------------------
# BatchNorm scale/shift from partial stats (training) or running stats (eval)
# --------------------------------------------------------------------------------------
def _bn_scale_shift_train(stats, rows_per_tile, n_total, gamma_p, beta_p):
    s1 = stats[:, 0, :]                                   # (tiles, H)
    m2 = stats[:, 1, :]
    mean_t = s1 / rows_per_tile
    mean = jnp.sum(s1, axis=0, keepdims=True) / n_total
    var = (jnp.sum(m2, axis=0, keepdims=True)
           + jnp.sum(rows_per_tile * (mean_t - mean) ** 2, axis=0, keepdims=True)) / n_total
    var = jnp.maximum(var, 0.0)
    a = gamma_p * jax.lax.rsqrt(var + BN_EPS)
    c = beta_p - mean * a
    return a.astype(jnp.float32), c.astype(jnp.float32)


def _bn_scale_shift_eval(gamma_p, beta_p, bias_p, rm_p, rv_p):
    a = gamma_p * jax.lax.rsqrt(rv_p + BN_EPS)
    c = beta_p + a * (bias_p - rm_p)                      # pre-BN bias folded (exact)
    return a.astype(jnp.float32), c.astype(jnp.float32)


# --------------------------------------------------------------------------------------
# TempCNN forward
# --------------------------------------------------------------------------------------
def tempcnn_forward(x_btc, params, *, dropout, training=True, base_seed=0):
    """x: (B, T, C_in) channels-last (torch transposes to (B, C, T); same math)."""
    bsz, t, c_in = x_btc.shape
    kernel_size = params["convs"][0]["w"].shape[0]
    pad = kernel_size // 2

    # input: channel pad to lane multiple, bf16, halo pad along T for conv1
    cp_in = _round_up(c_in, LANE)
    h = _pad_last(x_btc.astype(jnp.float32), cp_in).astype(MATMUL_DTYPE)
    h = jnp.pad(h, ((0, 0), (pad, pad), (0, 0)))

    for li, p in enumerate(params["convs"]):
        ktaps, c, o = p["w"].shape
        cp = _round_up(c, LANE)
        op = _round_up(o, LANE)
        w_p = jnp.pad(p["w"], ((0, 0), (0, cp - c), (0, op - o))).astype(MATMUL_DTYPE)
        y, stats, rows_per_tile = conv_gemm_stats(h, w_p)            # (B, T, op) bf16
        gamma_p = _pad_last(p["gamma"], op)
        beta_p = _pad_last(p["beta"], op)
        if training:
            a, cshift = _bn_scale_shift_train(stats, rows_per_tile, bsz * t, gamma_p, beta_p)
        else:
            a, cshift = _bn_scale_shift_eval(gamma_p, beta_p,
                                             _pad_last(p["b"], op),
                                             _pad_last(p["running_mean"], op),
                                             _pad_last(p["running_var"], op, value=1.0))
        act = bn_relu_dropout(y.reshape(bsz * t, op), a, cshift, base_seed + li,
                              drop_p=dropout, training=training)
        act = act.reshape(bsz, t, op)
        if li + 1 < len(params["convs"]):
            h = jnp.pad(act, ((0, 0), (pad, pad), (0, 0)))           # T halo for next conv
        else:
            h = act

    # Flatten fused into the dense weight layout: conv3 output (B, T, Cp) -> (B, T*Cp)
    # (free reshape); dense weight rows permuted from torch's c*T+t order to t*Cp+c.
    cp = h.shape[-1]
    x_dense = h.reshape(bsz, t * cp)

    d = params["dense"]
    d_in, d_out = d["w"].shape
    assert d_in % t == 0, "dense d_in must equal hidden_dims * seq_len (torch flatten)"
    c_hid = d_in // t
    dop = _round_up(d_out, LANE)
    wd = d["w"].reshape(c_hid, t, d_out).transpose(1, 0, 2)           # (T, C, d_out)
    wd = jnp.pad(wd, ((0, 0), (0, cp - c_hid), (0, dop - d_out)))     # (T, Cp, dop)
    wd = wd.reshape(t * cp, dop).astype(MATMUL_DTYPE)
    y, stats, rows_per_tile = dense_gemm_stats(x_dense, wd)           # (B, dop) bf16
    gamma_p = _pad_last(d["gamma"], dop)
    beta_p = _pad_last(d["beta"], dop)
    if training:
        a, cshift = _bn_scale_shift_train(stats, rows_per_tile, bsz, gamma_p, beta_p)
    else:
        a, cshift = _bn_scale_shift_eval(gamma_p, beta_p,
                                         _pad_last(d["b"], dop),
                                         _pad_last(d["running_mean"], dop),
                                         _pad_last(d["running_var"], dop, value=1.0))
    hdense = bn_relu_dropout(y, a, cshift, base_seed + 101,
                             drop_p=dropout, training=training)       # (B, dop) bf16

    # Decoder: num_classes-wide output -> plain XLA GEMM (per perf review).
    dec = params["decoder"]
    wdec = jnp.pad(dec["w"], ((0, dop - d_out), (0, 0)))              # zero rows for pad cols
    logits = jnp.dot(hdense.astype(jnp.float32), wdec) + dec["b"]
    return logits


# --------------------------------------------------------------------------------------
# Torch-shaped parameter init
# --------------------------------------------------------------------------------------
def init_tempcnn_params(key, input_dim, num_classes, hidden_dims, kernel_size, max_seq_len):
    keys = jax.random.split(key, 5)
    params = {"convs": []}
    c_in = input_dim
    for i in range(3):
        kw, kb = jax.random.split(keys[i])
        bound = 1.0 / ((c_in * kernel_size) ** 0.5)
        params["convs"].append({
            "w": jax.random.uniform(kw, (kernel_size, c_in, hidden_dims), jnp.float32,
                                    -bound, bound),
            "b": jax.random.uniform(kb, (1, hidden_dims), jnp.float32, -bound, bound),
            "gamma": jnp.ones((1, hidden_dims), jnp.float32),
            "beta": jnp.zeros((1, hidden_dims), jnp.float32),
            "running_mean": jnp.zeros((1, hidden_dims), jnp.float32),
            "running_var": jnp.ones((1, hidden_dims), jnp.float32),
        })
        c_in = hidden_dims
    d_in, d_out = hidden_dims * max_seq_len, 4 * hidden_dims
    kw, kb = jax.random.split(keys[3])
    bound = 1.0 / (d_in ** 0.5)
    params["dense"] = {
        "w": jax.random.uniform(kw, (d_in, d_out), jnp.float32, -bound, bound),
        "b": jax.random.uniform(kb, (1, d_out), jnp.float32, -bound, bound),
        "gamma": jnp.ones((1, d_out), jnp.float32),
        "beta": jnp.zeros((1, d_out), jnp.float32),
        "running_mean": jnp.zeros((1, d_out), jnp.float32),
        "running_var": jnp.ones((1, d_out), jnp.float32),
    }
    kw, kb = jax.random.split(keys[4])
    bound = 1.0 / (d_out ** 0.5)
    params["decoder"] = {
        "w": jax.random.uniform(kw, (d_out, num_classes), jnp.float32, -bound, bound),
        "b": jax.random.uniform(kb, (1, num_classes), jnp.float32, -bound, bound),
    }
    return params


if __name__ == "__main__":
    batch = 2
    input_dim = 4        # channels
    seq_len = 8          # == max_seq_len
    hidden_dims = 32
    kernel_size = 5
    num_classes = 5
    dropout = 0.2

    key = jax.random.PRNGKey(0)
    k_x, k_p = jax.random.split(key)
    x = jax.random.normal(k_x, (batch, seq_len, input_dim), jnp.float32)
    params = init_tempcnn_params(k_p, input_dim, num_classes, hidden_dims,
                                 kernel_size, seq_len)

    out = tempcnn_forward(x, params, dropout=dropout, training=True, base_seed=1234)
    out = jax.block_until_ready(out)
    assert out.shape == (batch, num_classes)
    assert out.dtype == jnp.float32
    assert bool(jnp.all(jnp.isfinite(out)))
    print("KERNEL_OK")
</pallas_src>

<mosaic_0001>
module attributes {stable_mosaic.version = 11 : i64} {
  func.func @_conv_gemm_stats_kernel(%arg0: i32, %arg1: memref<2x12x128xbf16, #tpu.memory_space<vmem>>, %arg2: memref<5x128x128xbf16, #tpu.memory_space<vmem>>, %arg3: memref<2x8x128xbf16, #tpu.memory_space<vmem>>, %arg4: memref<1x2x128xf32, #tpu.memory_space<vmem>>) attributes {dimension_semantics = [#tpu.dimension_semantics<parallel>], iteration_bounds = array<i64: 1>, scalar_prefetch = 0 : i64, scratch_operands = 0 : i64, tpu.core_type = #tpu.core_type<tc>, window_params = [{transform_indices = @transform_0, window_bounds = array<i64: 2, 12, 128>}, {pipeline_mode = #tpu.pipeline_mode<synchronous>, transform_indices = @transform_1, window_bounds = array<i64: 5, 128, 128>}, {transform_indices = @transform_2, window_bounds = array<i64: 2, 8, 128>}, {transform_indices = @transform_3, window_bounds = array<i64: 1, 2, 128>}]} {
    %cst = arith.constant 0.000000e+00 : f32
    %0 = vector.broadcast %cst : f32 to vector<1x128xf32>
    %cst_0 = arith.constant 0.000000e+00 : f32
    %1 = vector.broadcast %cst_0 : f32 to vector<8x128xf32>
    %c0 = arith.constant 0 : index
    %c0_1 = arith.constant 0 : index
    %c0_2 = arith.constant 0 : index
    %2 = vector.load %arg1[%c0, %c0_1, %c0_2] : memref<2x12x128xbf16, #tpu.memory_space<vmem>>, vector<1x8x128xbf16>
    %3 = vector.shape_cast %2 : vector<1x8x128xbf16> to vector<8x128xbf16>
    %c0_3 = arith.constant 0 : index
    %c0_4 = arith.constant 0 : index
    %c0_5 = arith.constant 0 : index
    %4 = vector.load %arg2[%c0_3, %c0_4, %c0_5] : memref<5x128x128xbf16, #tpu.memory_space<vmem>>, vector<1x128x128xbf16>
    %5 = vector.shape_cast %4 : vector<1x128x128xbf16> to vector<128x128xbf16>
    %cst_6 = arith.constant dense<0.000000e+00> : vector<8x128xf32>
    %6 = tpu.matmul %3, %5, %cst_6 {dimension_numbers = #tpu.dot_dimension_numbers<[1], [0], [0], [1], [0, 0, 1, 1], [], []>} : vector<8x128xbf16>, vector<128x128xbf16>, vector<8x128xf32> -> vector<8x128xf32>
    %7 = arith.addf %1, %6 : vector<8x128xf32>
    %c0_7 = arith.constant 0 : index
    %c1 = arith.constant 1 : index
    %c0_8 = arith.constant 0 : index
    %8 = vector.load %arg1[%c0_7, %c1, %c0_8] : memref<2x12x128xbf16, #tpu.memory_space<vmem>>, vector<1x8x128xbf16>
    %9 = vector.shape_cast %8 : vector<1x8x128xbf16> to vector<8x128xbf16>
    %c1_9 = arith.constant 1 : index
    %c0_10 = arith.constant 0 : index
    %c0_11 = arith.constant 0 : index
    %10 = vector.load %arg2[%c1_9, %c0_10, %c0_11] : memref<5x128x128xbf16, #tpu.memory_space<vmem>>, vector<1x128x128xbf16>
    %11 = vector.shape_cast %10 : vector<1x128x128xbf16> to vector<128x128xbf16>
    %cst_12 = arith.constant dense<0.000000e+00> : vector<8x128xf32>
    %12 = tpu.matmul %9, %11, %cst_12 {dimension_numbers = #tpu.dot_dimension_numbers<[1], [0], [0], [1], [0, 0, 1, 1], [], []>} : vector<8x128xbf16>, vector<128x128xbf16>, vector<8x128xf32> -> vector<8x128xf32>
    %13 = arith.addf %7, %12 : vector<8x128xf32>
    %c0_13 = arith.constant 0 : index
    %c2 = arith.constant 2 : index
    %c0_14 = arith.constant 0 : index
    %14 = vector.load %arg1[%c0_13, %c2, %c0_14] : memref<2x12x128xbf16, #tpu.memory_space<vmem>>, vector<1x8x128xbf16>
    %15 = vector.shape_cast %14 : vector<1x8x128xbf16> to vector<8x128xbf16>
    %c2_15 = arith.constant 2 : index
    %c0_16 = arith.constant 0 : index
    %c0_17 = arith.constant 0 : index
    %16 = vector.load %arg2[%c2_15, %c0_16, %c0_17] : memref<5x128x128xbf16, #tpu.memory_space<vmem>>, vector<1x128x128xbf16>
    %17 = vector.shape_cast %16 : vector<1x128x128xbf16> to vector<128x128xbf16>
    %cst_18 = arith.constant dense<0.000000e+00> : vector<8x128xf32>
    %18 = tpu.matmul %15, %17, %cst_18 {dimension_numbers = #tpu.dot_dimension_numbers<[1], [0], [0], [1], [0, 0, 1, 1], [], []>} : vector<8x128xbf16>, vector<128x128xbf16>, vector<8x128xf32> -> vector<8x128xf32>
    %19 = arith.addf %13, %18 : vector<8x128xf32>
    %c0_19 = arith.constant 0 : index
    %c3 = arith.constant 3 : index
    %c0_20 = arith.constant 0 : index
    %20 = vector.load %arg1[%c0_19, %c3, %c0_20] : memref<2x12x128xbf16, #tpu.memory_space<vmem>>, vector<1x8x128xbf16>
    %21 = vector.shape_cast %20 : vector<1x8x128xbf16> to vector<8x128xbf16>
    %c3_21 = arith.constant 3 : index
    %c0_22 = arith.constant 0 : index
    %c0_23 = arith.constant 0 : index
    %22 = vector.load %arg2[%c3_21, %c0_22, %c0_23] : memref<5x128x128xbf16, #tpu.memory_space<vmem>>, vector<1x128x128xbf16>
    %23 = vector.shape_cast %22 : vector<1x128x128xbf16> to vector<128x128xbf16>
    %cst_24 = arith.constant dense<0.000000e+00> : vector<8x128xf32>
    %24 = tpu.matmul %21, %23, %cst_24 {dimension_numbers = #tpu.dot_dimension_numbers<[1], [0], [0], [1], [0, 0, 1, 1], [], []>} : vector<8x128xbf16>, vector<128x128xbf16>, vector<8x128xf32> -> vector<8x128xf32>
    %25 = arith.addf %19, %24 : vector<8x128xf32>
    %c0_25 = arith.constant 0 : index
    %c4 = arith.constant 4 : index
    %c0_26 = arith.constant 0 : index
    %26 = vector.load %arg1[%c0_25, %c4, %c0_26] : memref<2x12x128xbf16, #tpu.memory_space<vmem>>, vector<1x8x128xbf16>
    %27 = vector.shape_cast %26 : vector<1x8x128xbf16> to vector<8x128xbf16>
    %c4_27 = arith.constant 4 : index
    %c0_28 = arith.constant 0 : index
    %c0_29 = arith.constant 0 : index
    %28 = vector.load %arg2[%c4_27, %c0_28, %c0_29] : memref<5x128x128xbf16, #tpu.memory_space<vmem>>, vector<1x128x128xbf16>
    %29 = vector.shape_cast %28 : vector<1x128x128xbf16> to vector<128x128xbf16>
    %cst_30 = arith.constant dense<0.000000e+00> : vector<8x128xf32>
    %30 = tpu.matmul %27, %29, %cst_30 {dimension_numbers = #tpu.dot_dimension_numbers<[1], [0], [0], [1], [0, 0, 1, 1], [], []>} : vector<8x128xbf16>, vector<128x128xbf16>, vector<8x128xf32> -> vector<8x128xf32>
    %31 = arith.addf %25, %30 : vector<8x128xf32>
    %32 = arith.truncf %31 : vector<8x128xf32> to vector<8x128xbf16>
    %c0_31 = arith.constant 0 : index
    %c0_32 = arith.constant 0 : index
    %c0_33 = arith.constant 0 : index
    %33 = vector.load %arg3[%c0_31, %c0_32, %c0_33] : memref<2x8x128xbf16, #tpu.memory_space<vmem>>, vector<1x8x128xbf16>
    %34 = vector.shape_cast %33 : vector<1x8x128xbf16> to vector<8x128xbf16>
    %35 = vector.shape_cast %32 : vector<8x128xbf16> to vector<1x8x128xbf16>
    tpu.vector_store %arg3[%c0_31, %c0_32, %c0_33], %35 {strides = array<i32>} : memref<2x8x128xbf16, #tpu.memory_space<vmem>>, vector<1x8x128xbf16>,
    %cst_34 = arith.constant dense<0.000000e+00> : vector<128xf32>
    %36 = vector.multi_reduction <add>, %31, %cst_34 [0] : vector<8x128xf32> to vector<128xf32>
    %37 = vector.shape_cast %36 : vector<128xf32> to vector<1x128xf32>
    %38 = arith.addf %0, %37 : vector<1x128xf32>
    %cst_35 = arith.constant 0.000000e+00 : f32
    %39 = vector.broadcast %cst_35 : f32 to vector<8x128xf32>
    %c1_36 = arith.constant 1 : index
    %c0_37 = arith.constant 0 : index
    %c0_38 = arith.constant 0 : index
    %40 = vector.load %arg1[%c1_36, %c0_37, %c0_38] : memref<2x12x128xbf16, #tpu.memory_space<vmem>>, vector<1x8x128xbf16>
    %41 = vector.shape_cast %40 : vector<1x8x128xbf16> to vector<8x128xbf16>
    %c0_39 = arith.constant 0 : index
    %c0_40 = arith.constant 0 : index
    %c0_41 = arith.constant 0 : index
    %42 = vector.load %arg2[%c0_39, %c0_40, %c0_41] : memref<5x128x128xbf16, #tpu.memory_space<vmem>>, vector<1x128x128xbf16>
    %43 = vector.shape_cast %42 : vector<1x128x128xbf16> to vector<128x128xbf16>
    %cst_42 = arith.constant dense<0.000000e+00> : vector<8x128xf32>
    %44 = tpu.matmul %41, %43, %cst_42 {dimension_numbers = #tpu.dot_dimension_numbers<[1], [0], [0], [1], [0, 0, 1, 1], [], []>} : vector<8x128xbf16>, vector<128x128xbf16>, vector<8x128xf32> -> vector<8x128xf32>
    %45 = arith.addf %39, %44 : vector<8x128xf32>
    %c1_43 = arith.constant 1 : index
    %c1_44 = arith.constant 1 : index
    %c0_45 = arith.constant 0 : index
    %46 = vector.load %arg1[%c1_43, %c1_44, %c0_45] : memref<2x12x128xbf16, #tpu.memory_space<vmem>>, vector<1x8x128xbf16>
    %47 = vector.shape_cast %46 : vector<1x8x128xbf16> to vector<8x128xbf16>
    %c1_46 = arith.constant 1 : index
    %c0_47 = arith.constant 0 : index
    %c0_48 = arith.constant 0 : index
    %48 = vector.load %arg2[%c1_46, %c0_47, %c0_48] : memref<5x128x128xbf16, #tpu.memory_space<vmem>>, vector<1x128x128xbf16>
    %49 = vector.shape_cast %48 : vector<1x128x128xbf16> to vector<128x128xbf16>
    %cst_49 = arith.constant dense<0.000000e+00> : vector<8x128xf32>
    %50 = tpu.matmul %47, %49, %cst_49 {dimension_numbers = #tpu.dot_dimension_numbers<[1], [0], [0], [1], [0, 0, 1, 1], [], []>} : vector<8x128xbf16>, vector<128x128xbf16>, vector<8x128xf32> -> vector<8x128xf32>
    %51 = arith.addf %45, %50 : vector<8x128xf32>
    %c1_50 = arith.constant 1 : index
    %c2_51 = arith.constant 2 : index
    %c0_52 = arith.constant 0 : index
    %52 = vector.load %arg1[%c1_50, %c2_51, %c0_52] : memref<2x12x128xbf16, #tpu.memory_space<vmem>>, vector<1x8x128xbf16>
    %53 = vector.shape_cast %52 : vector<1x8x128xbf16> to vector<8x128xbf16>
    %c2_53 = arith.constant 2 : index
    %c0_54 = arith.constant 0 : index
    %c0_55 = arith.constant 0 : index
    %54 = vector.load %arg2[%c2_53, %c0_54, %c0_55] : memref<5x128x128xbf16, #tpu.memory_space<vmem>>, vector<1x128x128xbf16>
    %55 = vector.shape_cast %54 : vector<1x128x128xbf16> to vector<128x128xbf16>
    %cst_56 = arith.constant dense<0.000000e+00> : vector<8x128xf32>
    %56 = tpu.matmul %53, %55, %cst_56 {dimension_numbers = #tpu.dot_dimension_numbers<[1], [0], [0], [1], [0, 0, 1, 1], [], []>} : vector<8x128xbf16>, vector<128x128xbf16>, vector<8x128xf32> -> vector<8x128xf32>
    %57 = arith.addf %51, %56 : vector<8x128xf32>
    %c1_57 = arith.constant 1 : index
    %c3_58 = arith.constant 3 : index
    %c0_59 = arith.constant 0 : index
    %58 = vector.load %arg1[%c1_57, %c3_58, %c0_59] : memref<2x12x128xbf16, #tpu.memory_space<vmem>>, vector<1x8x128xbf16>
    %59 = vector.shape_cast %58 : vector<1x8x128xbf16> to vector<8x128xbf16>
    %c3_60 = arith.constant 3 : index
    %c0_61 = arith.constant 0 : index
    %c0_62 = arith.constant 0 : index
    %60 = vector.load %arg2[%c3_60, %c0_61, %c0_62] : memref<5x128x128xbf16, #tpu.memory_space<vmem>>, vector<1x128x128xbf16>
    %61 = vector.shape_cast %60 : vector<1x128x128xbf16> to vector<128x128xbf16>
    %cst_63 = arith.constant dense<0.000000e+00> : vector<8x128xf32>
    %62 = tpu.matmul %59, %61, %cst_63 {dimension_numbers = #tpu.dot_dimension_numbers<[1], [0], [0], [1], [0, 0, 1, 1], [], []>} : vector<8x128xbf16>, vector<128x128xbf16>, vector<8x128xf32> -> vector<8x128xf32>
    %63 = arith.addf %57, %62 : vector<8x128xf32>
    %c1_64 = arith.constant 1 : index
    %c4_65 = arith.constant 4 : index
    %c0_66 = arith.constant 0 : index
    %64 = vector.load %arg1[%c1_64, %c4_65, %c0_66] : memref<2x12x128xbf16, #tpu.memory_space<vmem>>, vector<1x8x128xbf16>
    %65 = vector.shape_cast %64 : vector<1x8x128xbf16> to vector<8x128xbf16>
    %c4_67 = arith.constant 4 : index
    %c0_68 = arith.constant 0 : index
    %c0_69 = arith.constant 0 : index
    %66 = vector.load %arg2[%c4_67, %c0_68, %c0_69] : memref<5x128x128xbf16, #tpu.memory_space<vmem>>, vector<1x128x128xbf16>
    %67 = vector.shape_cast %66 : vector<1x128x128xbf16> to vector<128x128xbf16>
    %cst_70 = arith.constant dense<0.000000e+00> : vector<8x128xf32>
    %68 = tpu.matmul %65, %67, %cst_70 {dimension_numbers = #tpu.dot_dimension_numbers<[1], [0], [0], [1], [0, 0, 1, 1], [], []>} : vector<8x128xbf16>, vector<128x128xbf16>, vector<8x128xf32> -> vector<8x128xf32>
    %69 = arith.addf %63, %68 : vector<8x128xf32>
    %70 = arith.truncf %69 : vector<8x128xf32> to vector<8x128xbf16>
    %c1_71 = arith.constant 1 : index
    %c0_72 = arith.constant 0 : index
    %c0_73 = arith.constant 0 : index
    %71 = vector.load %arg3[%c1_71, %c0_72, %c0_73] : memref<2x8x128xbf16, #tpu.memory_space<vmem>>, vector<1x8x128xbf16>
    %72 = vector.shape_cast %71 : vector<1x8x128xbf16> to vector<8x128xbf16>
    %73 = vector.shape_cast %70 : vector<8x128xbf16> to vector<1x8x128xbf16>
    tpu.vector_store %arg3[%c1_71, %c0_72, %c0_73], %73 {strides = array<i32>} : memref<2x8x128xbf16, #tpu.memory_space<vmem>>, vector<1x8x128xbf16>,
    %cst_74 = arith.constant dense<0.000000e+00> : vector<128xf32>
    %74 = vector.multi_reduction <add>, %69, %cst_74 [0] : vector<8x128xf32> to vector<128xf32>
    %75 = vector.shape_cast %74 : vector<128xf32> to vector<1x128xf32>
    %76 = arith.addf %38, %75 : vector<1x128xf32>
    %cst_75 = arith.constant 6.250000e-02 : f32
    %77 = vector.broadcast %cst_75 : f32 to vector<1x128xf32>
    %78 = arith.mulf %76, %77 : vector<1x128xf32>
    %cst_76 = arith.constant 0.000000e+00 : f32
    %79 = vector.broadcast %cst_76 : f32 to vector<1x128xf32>
    %80 = vector.broadcast %78 : vector<1x128xf32> to vector<8x128xf32>
    %81 = arith.subf %31, %80 : vector<8x128xf32>
    %82 = arith.mulf %81, %81 : vector<8x128xf32>
    %cst_77 = arith.constant dense<0.000000e+00> : vector<128xf32>
    %83 = vector.multi_reduction <add>, %82, %cst_77 [0] : vector<8x128xf32> to vector<128xf32>
    %84 = vector.shape_cast %83 : vector<128xf32> to vector<1x128xf32>
    %85 = arith.addf %79, %84 : vector<1x128xf32>
    %86 = vector.broadcast %78 : vector<1x128xf32> to vector<8x128xf32>
    %87 = arith.subf %69, %86 : vector<8x128xf32>
    %88 = arith.mulf %87, %87 : vector<8x128xf32>
    %cst_78 = arith.constant dense<0.000000e+00> : vector<128xf32>
    %89 = vector.multi_reduction <add>, %88, %cst_78 [0] : vector<8x128xf32> to vector<128xf32>
    %90 = vector.shape_cast %89 : vector<128xf32> to vector<1x128xf32>
    %91 = arith.addf %85, %90 : vector<1x128xf32>
    %c0_79 = arith.constant 0 : index
    %c0_80 = arith.constant 0 : index
    %c0_81 = arith.constant 0 : index
    %92 = vector.load %arg4[%c0_79, %c0_80, %c0_81] : memref<1x2x128xf32, #tpu.memory_space<vmem>>, vector<1x1x128xf32>
    %93 = vector.shape_cast %92 : vector<1x1x128xf32> to vector<1x128xf32>
    %94 = vector.shape_cast %76 : vector<1x128xf32> to vector<1x1x128xf32>
    tpu.vector_store %arg4[%c0_79, %c0_80, %c0_81], %94 {strides = array<i32>} : memref<1x2x128xf32, #tpu.memory_space<vmem>>, vector<1x1x128xf32>,
    %c0_82 = arith.constant 0 : index
    %c1_83 = arith.constant 1 : index
    %c0_84 = arith.constant 0 : index
    %95 = vector.load %arg4[%c0_82, %c1_83, %c0_84] : memref<1x2x128xf32, #tpu.memory_space<vmem>>, vector<1x1x128xf32>
    %96 = vector.shape_cast %95 : vector<1x1x128xf32> to vector<1x128xf32>
    %97 = vector.shape_cast %91 : vector<1x128xf32> to vector<1x1x128xf32>
    tpu.vector_store %arg4[%c0_82, %c1_83, %c0_84], %97 {strides = array<i32>} : memref<1x2x128xf32, #tpu.memory_space<vmem>>, vector<1x1x128xf32>,
    return
  }
  func.func @transform_0(%arg0: i32) -> (i32, i32, i32) {
    %c0_i32 = arith.constant 0 : i32
    %c0_i32_0 = arith.constant 0 : i32
    %c0_i32_1 = arith.constant 0 : i32
    return %arg0, %c0_i32, %c0_i32_0 : i32, i32, i32
  }
  func.func @transform_1(%arg0: i32) -> (i32, i32, i32) {
    %c0_i32 = arith.constant 0 : i32
    %c0_i32_0 = arith.constant 0 : i32
    %c0_i32_1 = arith.constant 0 : i32
    %c0_i32_2 = arith.constant 0 : i32
    return %c0_i32, %c0_i32_0, %c0_i32_1 : i32, i32, i32
  }
  func.func @transform_2(%arg0: i32) -> (i32, i32, i32) {
    %c0_i32 = arith.constant 0 : i32
    %c0_i32_0 = arith.constant 0 : i32
    %c0_i32_1 = arith.constant 0 : i32
    return %arg0, %c0_i32, %c0_i32_0 : i32, i32, i32
  }
  func.func @transform_3(%arg0: i32) -> (i32, i32, i32) {
    %c0_i32 = arith.constant 0 : i32
    %c0_i32_0 = arith.constant 0 : i32
    %c0_i32_1 = arith.constant 0 : i32
    return %arg0, %c0_i32, %c0_i32_0 : i32, i32, i32
  }
}

</mosaic_0001>

<llo_original>
// kernel: tpu_custom_call.1
$region0: #{tpu_custom_call.1}
  #allocation0 [shape = 'u32[]', space=smem, size = 0x4, offset = 0x4, fixed_abs, tag = 'smem constant byte address 0x4 - core index']
  #allocation1 [shape = 'u32[144,128]{1,0:T(1,128)}', space=vmem, size = 0x12000, scoped, tag = 'internal scratch']
  %s0 = inlined_call_operand.vmem [shape: bf16[2,12,128], index: 0, kind: input, shape index: {}]
  %s1 = inlined_call_operand.hbm [shape: bf16[5,128,128], index: 1, kind: input, shape index: {}]
  %s2 = inlined_call_operand.hbm [shape: bf16[2,8,128], index: 2, kind: output, shape index: {0}]
  %s3 = inlined_call_operand.hbm [shape: f32[1,2,128], index: 3, kind: output, shape index: {1}]
  %4 = xla_tuple %s2, %s3
  %s5 = sld [smem:[#allocation0]]
  $region30: #{tpu_custom_call.1} parent=0
    _
  %s7 = ssub.s32 1, %s5
  %s8 = scalar_select 0, %s7, %s5
  $region1: #{tpu_custom_call.1} parent=0
    #allocation2 [shape = 'u8[163840]{0}', space=vmem, size = 0x28000, scoped, tag = 'input window, operand 1, single buffered']
    #allocation3 [shape = 's32[1]{0}', space=sflag, size = 0x4, scoped, tag = 'scoped memory for tpu_custom_call.1']
    #allocation4 [shape = 's32[1]{0}', space=sflag, size = 0x4, scoped, tag = 'scoped memory for tpu_custom_call.1']
    #allocation5 [shape = 'u8[4096]{0}', space=vmem, size = 0x1000, scoped, tag = 'output window, operand 0, single buffered']
    #allocation6 [shape = 'u8[1024]{0}', space=vmem, size = 0x400, scoped, tag = 'output window, operand 1, single buffered']
    #allocation7 [shape = 's32[1]{0}', space=sflag, size = 0x4, scoped, tag = 'scoped memory for tpu_custom_call.1']
    %9 = vsyncpa [#allocation3], 0
    %10 = vsyncpa [#allocation4], 0
    %11 = vsyncpa [#allocation7], 0
    // Predicated region
    $region2: #{tpu_custom_call.1} parent=1 // pred_check
      _
    $region3: #{tpu_custom_call.1} parent=1 // pred_check_branch
      %13 = sbr.rel (0) target = $region5
    $region4: #{tpu_custom_call.1} parent=1 // pred_region
      _
    $region5: #{tpu_custom_call.1} parent=1 // pred_fallthru
      _
    // Predicated region
    $region6: #{tpu_custom_call.1} parent=1 // pred_check
      _
    $region7: #{tpu_custom_call.1} parent=1 // pred_check_branch
      %15 = sbr.rel (0) target = $region9
    $region8: #{tpu_custom_call.1} parent=1 // pred_region
      %s17 = ssub.s32 5120, 5120
      %18 = vsyncadd [#allocation3], %s17
      %s19 = sshll.u32 [#allocation2], 4
      %s20 = int_to_ptr.vmem [resolvable:$true] %s19
      %25 = dma.hbm_to_vmem [thread:$0]  %s1, 5120, %s20, [#allocation3], 64, 64, 4
    $region9: #{tpu_custom_call.1} parent=1 // pred_fallthru
      _
    // Predicated region
    $region10: #{tpu_custom_call.1} parent=1 // pred_check
      _
    $region11: #{tpu_custom_call.1} parent=1 // pred_check_branch
      %27 = sbr.rel (0) target = $region13
    $region12: #{tpu_custom_call.1} parent=1 // pred_region
      %28 = dma.done [#allocation3], 5120
    $region13: #{tpu_custom_call.1} parent=1 // pred_fallthru
      _
    %v30 = vld [vmem:[%s0] sm:$0xf]
    %v31 = vld [vmem:[#allocation2] sm:$0xf]
    %v32 = vld [vmem:[#allocation2 + $0x4] sm:$0xf]
    %v33 = vld [vmem:[#allocation2 + $0x8] sm:$0xf]
    %v34 = vld [vmem:[#allocation2 + $0xc] sm:$0xf]
    %v35 = vld [vmem:[#allocation2 + $0x10] sm:$0xf]
    %v36 = vld [vmem:[#allocation2 + $0x14] sm:$0xf]
    %v37 = vld [vmem:[#allocation2 + $0x18] sm:$0xf]
    %v38 = vld [vmem:[#allocation2 + $0x1c] sm:$0xf]
    %v39 = vld [vmem:[#allocation2 + $0x20] sm:$0xf]
    %v40 = vld [vmem:[#allocation2 + $0x24] sm:$0xf]
    %v41 = vld [vmem:[#allocation2 + $0x28] sm:$0xf]
    %v42 = vld [vmem:[#allocation2 + $0x2c] sm:$0xf]
    %v43 = vld [vmem:[#allocation2 + $0x30] sm:$0xf]
    %v44 = vld [vmem:[#allocation2 + $0x34] sm:$0xf]
    %v45 = vld [vmem:[#allocation2 + $0x38] sm:$0xf]
    %v46 = vld [vmem:[#allocation2 + $0x3c] sm:$0xf]
    %v47 = vld [vmem:[%s0 + $0x4] sm:$0x1]
    %s48 = scalar_lea.vmem [#allocation2], 64
    %v49 = vld [vmem:[%s48] sm:$0xf]
    %v50 = vld [vmem:[%s48 + $0x4] sm:$0xf]
    %v51 = vld [vmem:[%s48 + $0x8] sm:$0xf]
    %v52 = vld [vmem:[%s48 + $0xc] sm:$0xf]
    %v53 = vld [vmem:[%s48 + $0x10] sm:$0xf]
    %v54 = vld [vmem:[%s48 + $0x14] sm:$0xf]
    %v55 = vld [vmem:[%s48 + $0x18] sm:$0xf]
    %v56 = vld [vmem:[%s48 + $0x1c] sm:$0xf]
    %v57 = vld [vmem:[%s48 + $0x20] sm:$0xf]
    %v58 = vld [vmem:[%s48 + $0x24] sm:$0xf]
    %v59 = vld [vmem:[%s48 + $0x28] sm:$0xf]
    %v60 = vld [vmem:[%s48 + $0x2c] sm:$0xf]
    %v61 = vld [vmem:[%s48 + $0x30] sm:$0xf]
    %v62 = vld [vmem:[%s48 + $0x34] sm:$0xf]
    %v63 = vld [vmem:[%s48 + $0x38] sm:$0xf]
    %v64 = vld [vmem:[%s48 + $0x3c] sm:$0xf]
    %v67 = vunpack.c.l.b16 %v30
    %v68 = vunpack.c.l.b16 %v47
    %v69 = vpack.c.b16 %v68, %v67
    %v71 = vshrl.u32 %v69, 16
    %v73 = vshll.u32 %v69, 16
    %v75 = vrot.slane %v73, 1
    %v76 = vor.u32 %v71, %v75
    %v94 = vunpack.c.l.b16 %v49
    %v95 = vunpack.c.l.b16 %v50
    %v96 = vunpack.c.l.b16 %v51
    %v97 = vunpack.c.l.b16 %v52
    %v98 = vunpack.c.l.b16 %v53
    %v99 = vunpack.c.l.b16 %v54
    %v100 = vunpack.c.l.b16 %v55
    %v101 = vunpack.c.l.b16 %v56
    %v102 = vunpack.c.l.b16 %v57
    %v103 = vunpack.c.l.b16 %v58
    %v104 = vunpack.c.l.b16 %v59
    %v105 = vunpack.c.l.b16 %v60
    %v106 = vunpack.c.l.b16 %v61
    %v107 = vunpack.c.l.b16 %v62
    %v108 = vunpack.c.l.b16 %v63
    %v109 = vunpack.c.l.b16 %v64
    %v110 = vpack.c.b16 %v95, %v94
    %v111 = vpack.c.b16 %v97, %v96
    %v112 = vpack.c.b16 %v99, %v98
    %v113 = vpack.c.b16 %v101, %v100
    %v114 = vpack.c.b16 %v103, %v102
    %v115 = vpack.c.b16 %v105, %v104
    %v116 = vpack.c.b16 %v107, %v106
    %v117 = vpack.c.b16 %v109, %v108
    %126 = vmatprep.subr.bf16.mxu0 0
    %127 = vmatpush1.bf16.msra.mxu0 %v117
    %128 = vmatprep.subr.bf16.mxu0 0
    %129 = vmatpush1.bf16.msra.mxu0 %v116
    %130 = vmatprep.subr.bf16.mxu0 0
    %131 = vmatpush1.bf16.msra.mxu0 %v115
    %132 = vmatprep.subr.bf16.mxu0 0
    %133 = vmatpush1.bf16.msra.mxu0 %v114
    %134 = vmatprep.subr.bf16.mxu0 0
    %135 = vmatpush1.bf16.msra.mxu0 %v113
    %136 = vmatprep.subr.bf16.mxu0 0
    %137 = vmatpush1.bf16.msra.mxu0 %v112
    %138 = vmatprep.subr.bf16.mxu0 0
    %139 = vmatpush1.bf16.msra.mxu0 %v111
    %140 = vmatprep.subr.bf16.mxu0 0
    %141 = vmatpush1.bf16.msra.mxu0 %v110
    %142 = vmatprep.subr.bf16.mxu0 0
    %143 = vmatpush2.bf16.msra.mxu0 0
    %144 = vmatprep.subr.bf16.mxu0 0
    %145 = vmatpush2.bf16.msra.mxu0 0
    %146 = vmatprep.subr.bf16.mxu0 0
    %147 = vmatpush2.bf16.msra.mxu0 0
    %148 = vmatprep.subr.bf16.mxu0 0
    %149 = vmatpush2.bf16.msra.mxu0 0
    %150 = vmatprep.subr.bf16.mxu0 0
    %151 = vmatpush2.bf16.msra.mxu0 0
    %152 = vmatprep.subr.bf16.mxu0 0
    %153 = vmatpush2.bf16.msra.mxu0 0
    %154 = vmatprep.subr.bf16.mxu0 0
    %155 = vmatpush2.bf16.msra.mxu0 0
    %156 = vmatprep.subr.bf16.mxu0 0
    %157 = vmatpush2.bf16.msra.mxu0 0
    %158 = vmatprep.mubr.bf16.mxu0 0
    %159 = vmatmul.mubr.bf16.gmra.mxu0 %v76
    %v160 = vpop.f32.mrf.mxu0
    %v161 = vadd.f32 0.0, %v160
    %v162 = vpop.f32.mrf.mxu0
    %v163 = vpop.f32.mrf.mxu0
    %v164 = vpop.f32.mrf.mxu0
    %165 = vdwg.mxu0
    %v182 = vunpack.c.l.b16 %v31
    %v183 = vunpack.c.l.b16 %v32
    %v184 = vunpack.c.l.b16 %v33
    %v185 = vunpack.c.l.b16 %v34
    %v186 = vunpack.c.l.b16 %v35
    %v187 = vunpack.c.l.b16 %v36
    %v188 = vunpack.c.l.b16 %v37
    %v189 = vunpack.c.l.b16 %v38
    %v190 = vunpack.c.l.b16 %v39
    %v191 = vunpack.c.l.b16 %v40
    %v192 = vunpack.c.l.b16 %v41
    %v193 = vunpack.c.l.b16 %v42
    %v194 = vunpack.c.l.b16 %v43
    %v195 = vunpack.c.l.b16 %v44
    %v196 = vunpack.c.l.b16 %v45
    %v197 = vunpack.c.l.b16 %v46
    %v198 = vpack.c.b16 %v183, %v182
    %v199 = vpack.c.b16 %v185, %v184
    %v200 = vpack.c.b16 %v187, %v186
    %v201 = vpack.c.b16 %v189, %v188
    %v202 = vpack.c.b16 %v191, %v190
    %v203 = vpack.c.b16 %v193, %v192
    %v204 = vpack.c.b16 %v195, %v194
    %v205 = vpack.c.b16 %v197, %v196
    %214 = vmatprep.subr.bf16.mxu0 0
    %215 = vmatpush1.bf16.msra.mxu0 %v205
    %216 = vmatprep.subr.bf16.mxu0 0
    %217 = vmatpush1.bf16.msra.mxu0 %v204
    %218 = vmatprep.subr.bf16.mxu0 0
    %219 = vmatpush1.bf16.msra.mxu0 %v203
    %220 = vmatprep.subr.bf16.mxu0 0
    %221 = vmatpush1.bf16.msra.mxu0 %v202
    %222 = vmatprep.subr.bf16.mxu0 0
    %223 = vmatpush1.bf16.msra.mxu0 %v201
    %224 = vmatprep.subr.bf16.mxu0 0
    %225 = vmatpush1.bf16.msra.mxu0 %v200
    %226 = vmatprep.subr.bf16.mxu0 0
    %227 = vmatpush1.bf16.msra.mxu0 %v199
    %228 = vmatprep.subr.bf16.mxu0 0
    %229 = vmatpush1.bf16.msra.mxu0 %v198
    %230 = vmatprep.subr.bf16.mxu0 0
    %231 = vmatpush2.bf16.msra.mxu0 0
    %232 = vmatprep.subr.bf16.mxu0 0
    %233 = vmatpush2.bf16.msra.mxu0 0
    %234 = vmatprep.subr.bf16.mxu0 0
    %235 = vmatpush2.bf16.msra.mxu0 0
    %236 = vmatprep.subr.bf16.mxu0 0
    %237 = vmatpush2.bf16.msra.mxu0 0
    %238 = vmatprep.subr.bf16.mxu0 0
    %239 = vmatpush2.bf16.msra.mxu0 0
    %240 = vmatprep.subr.bf16.mxu0 0
    %241 = vmatpush2.bf16.msra.mxu0 0
    %242 = vmatprep.subr.bf16.mxu0 0
    %243 = vmatpush2.bf16.msra.mxu0 0
    %244 = vmatprep.subr.bf16.mxu0 0
    %245 = vmatpush2.bf16.msra.mxu0 0
    %246 = vmatprep.mubr.bf16.mxu0 0
    %247 = vmatmul.mubr.bf16.gmra.mxu0 %v30
    %v248 = vpop.f32.mrf.mxu0
    %v249 = vadd.f32 %v161, %v248
    %v250 = vpop.f32.mrf.mxu0
    %v251 = vpop.f32.mrf.mxu0
    %v252 = vpop.f32.mrf.mxu0
    %253 = vdwg.mxu0
    %v254 = vld [vmem:[%s0] sm:$0xe]
    %s255 = scalar_lea.vmem [#allocation2], 128
    %v256 = vld [vmem:[%s255] sm:$0xf]
    %v257 = vld [vmem:[%s255 + $0x4] sm:$0xf]
    %v258 = vld [vmem:[%s255 + $0x8] sm:$0xf]
    %v259 = vld [vmem:[%s255 + $0xc] sm:$0xf]
    %v260 = vld [vmem:[%s255 + $0x10] sm:$0xf]
    %v261 = vld [vmem:[%s255 + $0x14] sm:$0xf]
    %v262 = vld [vmem:[%s255 + $0x18] sm:$0xf]
    %v263 = vld [vmem:[%s255 + $0x1c] sm:$0xf]
    %v264 = vld [vmem:[%s255 + $0x20] sm:$0xf]
    %v265 = vld [vmem:[%s255 + $0x24] sm:$0xf]
    %v266 = vld [vmem:[%s255 + $0x28] sm:$0xf]
    %v267 = vld [vmem:[%s255 + $0x2c] sm:$0xf]
    %v268 = vld [vmem:[%s255 + $0x30] sm:$0xf]
    %v269 = vld [vmem:[%s255 + $0x34] sm:$0xf]
    %v270 = vld [vmem:[%s255 + $0x38] sm:$0xf]
    %v271 = vld [vmem:[%s255 + $0x3c] sm:$0xf]
    %v273 = vunpack.c.l.b16 %v254
    %v274 = vpack.c.b16 %v68, %v273
    %v275 = vrot.slane %v274, 1
    %v293 = vunpack.c.l.b16 %v256
    %v294 = vunpack.c.l.b16 %v257
    %v295 = vunpack.c.l.b16 %v258
    %v296 = vunpack.c.l.b16 %v259
    %v297 = vunpack.c.l.b16 %v260
    %v298 = vunpack.c.l.b16 %v261
    %v299 = vunpack.c.l.b16 %v262
    %v300 = vunpack.c.l.b16 %v263
    %v301 = vunpack.c.l.b16 %v264
    %v302 = vunpack.c.l.b16 %v265
    %v303 = vunpack.c.l.b16 %v266
    %v304 = vunpack.c.l.b16 %v267
    %v305 = vunpack.c.l.b16 %v268
    %v306 = vunpack.c.l.b16 %v269
    %v307 = vunpack.c.l.b16 %v270
    %v308 = vunpack.c.l.b16 %v271
    %v309 = vpack.c.b16 %v294, %v293
    %v310 = vpack.c.b16 %v296, %v295
    %v311 = vpack.c.b16 %v298, %v297
    %v312 = vpack.c.b16 %v300, %v299
    %v313 = vpack.c.b16 %v302, %v301
    %v314 = vpack.c.b16 %v304, %v303
    %v315 = vpack.c.b16 %v306, %v305
    %v316 = vpack.c.b16 %v308, %v307
    %325 = vmatprep.subr.bf16.mxu0 0
    %326 = vmatpush1.bf16.msra.mxu0 %v316
    %327 = vmatprep.subr.bf16.mxu0 0
    %328 = vmatpush1.bf16.msra.mxu0 %v315
    %329 = vmatprep.subr.bf16.mxu0 0
    %330 = vmatpush1.bf16.msra.mxu0 %v314
    %331 = vmatprep.subr.bf16.mxu0 0
    %332 = vmatpush1.bf16.msra.mxu0 %v313
    %333 = vmatprep.subr.bf16.mxu0 0
    %334 = vmatpush1.bf16.msra.mxu0 %v312
    %335 = vmatprep.subr.bf16.mxu0 0
    %336 = vmatpush1.bf16.msra.mxu0 %v311
    %337 = vmatprep.subr.bf16.mxu0 0
    %338 = vmatpush1.bf16.msra.mxu0 %v310
    %339 = vmatprep.subr.bf16.mxu0 0
    %340 = vmatpush1.bf16.msra.mxu0 %v309
    %341 = vmatprep.subr.bf16.mxu0 0
    %342 = vmatpush2.bf16.msra.mxu0 0
    %343 = vmatprep.subr.bf16.mxu0 0
    %344 = vmatpush2.bf16.msra.mxu0 0
    %345 = vmatprep.subr.bf16.mxu0 0
    %346 = vmatpush2.bf16.msra.mxu0 0
    %347 = vmatprep.subr.bf16.mxu0 0
    %348 = vmatpush2.bf16.msra.mxu0 0
    %349 = vmatprep.subr.bf16.mxu0 0
    %350 = vmatpush2.bf16.msra.mxu0 0
    %351 = vmatprep.subr.bf16.mxu0 0
    %352 = vmatpush2.bf16.msra.mxu0 0
    %353 = vmatprep.subr.bf16.mxu0 0
    %354 = vmatpush2.bf16.msra.mxu0 0
    %355 = vmatprep.subr.bf16.mxu0 0
    %356 = vmatpush2.bf16.msra.mxu0 0
    %357 = vmatprep.mubr.bf16.mxu0 0
    %358 = vmatmul.mubr.bf16.gmra.mxu0 %v275
    %v359 = vpop.f32.mrf.mxu0
    %v360 = vadd.f32 0.0, %v359
    %v361 = vpop.f32.mrf.mxu0
    %v362 = vpop.f32.mrf.mxu0
    %v363 = vpop.f32.mrf.mxu0
    %364 = vdwg.mxu0
    %v365 = vadd.f32 %v249, %v360
    %v366 = vld [vmem:[%s0 + $0x4] sm:$0x3]
    %s367 = scalar_lea.vmem [#allocation2], 192
    %v368 = vld [vmem:[%s367] sm:$0xf]
    %v369 = vld [vmem:[%s367 + $0x4] sm:$0xf]
    %v370 = vld [vmem:[%s367 + $0x8] sm:$0xf]
    %v371 = vld [vmem:[%s367 + $0xc] sm:$0xf]
    %v372 = vld [vmem:[%s367 + $0x10] sm:$0xf]
    %v373 = vld [vmem:[%s367 + $0x14] sm:$0xf]
    %v374 = vld [vmem:[%s367 + $0x18] sm:$0xf]
    %v375 = vld [vmem:[%s367 + $0x1c] sm:$0xf]
    %v376 = vld [vmem:[%s367 + $0x20] sm:$0xf]
    %v377 = vld [vmem:[%s367 + $0x24] sm:$0xf]
    %v378 = vld [vmem:[%s367 + $0x28] sm:$0xf]
    %v379 = vld [vmem:[%s367 + $0x2c] sm:$0xf]
    %v380 = vld [vmem:[%s367 + $0x30] sm:$0xf]
    %v381 = vld [vmem:[%s367 + $0x34] sm:$0xf]
    %v382 = vld [vmem:[%s367 + $0x38] sm:$0xf]
    %v383 = vld [vmem:[%s367 + $0x3c] sm:$0xf]
    %v385 = vunpack.c.l.b16 %v366
    %v386 = vpack.c.b16 %v385, %v273
    %v388 = vshrl.u32 %v386, 16
    %v390 = vrot.slane %v388, 1
    %v391 = vshll.u32 %v386, 16
    %v393 = vrot.slane %v391, 2
    %v394 = vor.u32 %v390, %v393
    %v412 = vunpack.c.l.b16 %v368
    %v413 = vunpack.c.l.b16 %v369
    %v414 = vunpack.c.l.b16 %v370
    %v415 = vunpack.c.l.b16 %v371
    %v416 = vunpack.c.l.b16 %v372
    %v417 = vunpack.c.l.b16 %v373
    %v418 = vunpack.c.l.b16 %v374
    %v419 = vunpack.c.l.b16 %v375
    %v420 = vunpack.c.l.b16 %v376
    %v421 = vunpack.c.l.b16 %v377
    %v422 = vunpack.c.l.b16 %v378
    %v423 = vunpack.c.l.b16 %v379
    %v424 = vunpack.c.l.b16 %v380
    %v425 = vunpack.c.l.b16 %v381
    %v426 = vunpack.c.l.b16 %v382
    %v427 = vunpack.c.l.b16 %v383
    %v428 = vpack.c.b16 %v413, %v412
    %v429 = vpack.c.b16 %v415, %v414
    %v430 = vpack.c.b16 %v417, %v416
    %v431 = vpack.c.b16 %v419, %v418
    %v432 = vpack.c.b16 %v421, %v420
    %v433 = vpack.c.b16 %v423, %v422
    %v434 = vpack.c.b16 %v425, %v424
    %v435 = vpack.c.b16 %v427, %v426
    %444 = vmatprep.subr.bf16.mxu0 0
    %445 = vmatpush1.bf16.msra.mxu0 %v435
    %446 = vmatprep.subr.bf16.mxu0 0
    %447 = vmatpush1.bf16.msra.mxu0 %v434
    %448 = vmatprep.subr.bf16.mxu0 0
    %449 = vmatpush1.bf16.msra.mxu0 %v433
    %450 = vmatprep.subr.bf16.mxu0 0
    %451 = vmatpush1.bf16.msra.mxu0 %v432
    %452 = vmatprep.subr.bf16.mxu0 0
    %453 = vmatpush1.bf16.msra.mxu0 %v431
    %454 = vmatprep.subr.bf16.mxu0 0
    %455 = vmatpush1.bf16.msra.mxu0 %v430
    %456 = vmatprep.subr.bf16.mxu0 0
    %457 = vmatpush1.bf16.msra.mxu0 %v429
    %458 = vmatprep.subr.bf16.mxu0 0
    %459 = vmatpush1.bf16.msra.mxu0 %v428
    %460 = vmatprep.subr.bf16.mxu0 0
    %461 = vmatpush2.bf16.msra.mxu0 0
    %462 = vmatprep.subr.bf16.mxu0 0
    %463 = vmatpush2.bf16.msra.mxu0 0
    %464 = vmatprep.subr.bf16.mxu0 0
    %465 = vmatpush2.bf16.msra.mxu0 0
    %466 = vmatprep.subr.bf16.mxu0 0
    %467 = vmatpush2.bf16.msra.mxu0 0
    %468 = vmatprep.subr.bf16.mxu0 0
    %469 = vmatpush2.bf16.msra.mxu0 0
    %470 = vmatprep.subr.bf16.mxu0 0
    %471 = vmatpush2.bf16.msra.mxu0 0
    %472 = vmatprep.subr.bf16.mxu0 0
    %473 = vmatpush2.bf16.msra.mxu0 0
    %474 = vmatprep.subr.bf16.mxu0 0
    %475 = vmatpush2.bf16.msra.mxu0 0
    %476 = vmatprep.mubr.bf16.mxu0 0
    %477 = vmatmul.mubr.bf16.gmra.mxu0 %v394
    %v478 = vpop.f32.mrf.mxu0
    %v479 = vadd.f32 0.0, %v478
    %v480 = vpop.f32.mrf.mxu0
    %v481 = vpop.f32.mrf.mxu0
    %v482 = vpop.f32.mrf.mxu0
    %483 = vdwg.mxu0
    %v484 = vadd.f32 %v365, %v479
    %v485 = vld [vmem:[%s0] sm:$0xc]
    %s486 = scalar_lea.vmem [#allocation2], 256
    %v487 = vld [vmem:[%s486] sm:$0xf]
    %v488 = vld [vmem:[%s486 + $0x4] sm:$0xf]
    %v489 = vld [vmem:[%s486 + $0x8] sm:$0xf]
    %v490 = vld [vmem:[%s486 + $0xc] sm:$0xf]
    %v491 = vld [vmem:[%s486 + $0x10] sm:$0xf]
    %v492 = vld [vmem:[%s486 + $0x14] sm:$0xf]
    %v493 = vld [vmem:[%s486 + $0x18] sm:$0xf]
    %v494 = vld [vmem:[%s486 + $0x1c] sm:$0xf]
    %v495 = vld [vmem:[%s486 + $0x20] sm:$0xf]
    %v496 = vld [vmem:[%s486 + $0x24] sm:$0xf]
    %v497 = vld [vmem:[%s486 + $0x28] sm:$0xf]
    %v498 = vld [vmem:[%s486 + $0x2c] sm:$0xf]
    %v499 = vld [vmem:[%s486 + $0x30] sm:$0xf]
    %v500 = vld [vmem:[%s486 + $0x34] sm:$0xf]
    %v501 = vld [vmem:[%s486 + $0x38] sm:$0xf]
    %v502 = vld [vmem:[%s486 + $0x3c] sm:$0xf]
    %v504 = vunpack.c.l.b16 %v485
    %v505 = vpack.c.b16 %v385, %v504
    %v506 = vrot.slane %v505, 2
    %v524 = vunpack.c.l.b16 %v487
    %v525 = vunpack.c.l.b16 %v488
    %v526 = vunpack.c.l.b16 %v489
    %v527 = vunpack.c.l.b16 %v490
    %v528 = vunpack.c.l.b16 %v491
    %v529 = vunpack.c.l.b16 %v492
    %v530 = vunpack.c.l.b16 %v493
    %v531 = vunpack.c.l.b16 %v494
    %v532 = vunpack.c.l.b16 %v495
    %v533 = vunpack.c.l.b16 %v496
    %v534 = vunpack.c.l.b16 %v497
    %v535 = vunpack.c.l.b16 %v498
    %v536 = vunpack.c.l.b16 %v499
    %v537 = vunpack.c.l.b16 %v500
    %v538 = vunpack.c.l.b16 %v501
    %v539 = vunpack.c.l.b16 %v502
    %v540 = vpack.c.b16 %v525, %v524
    %v541 = vpack.c.b16 %v527, %v526
    %v542 = vpack.c.b16 %v529, %v528
    %v543 = vpack.c.b16 %v531, %v530
    %v544 = vpack.c.b16 %v533, %v532
    %v545 = vpack.c.b16 %v535, %v534
    %v546 = vpack.c.b16 %v537, %v536
    %v547 = vpack.c.b16 %v539, %v538
    %556 = vmatprep.subr.bf16.mxu0 0
    %557 = vmatpush1.bf16.msra.mxu0 %v547
    %558 = vmatprep.subr.bf16.mxu0 0
    %559 = vmatpush1.bf16.msra.mxu0 %v546
    %560 = vmatprep.subr.bf16.mxu0 0
    %561 = vmatpush1.bf16.msra.mxu0 %v545
    %562 = vmatprep.subr.bf16.mxu0 0
    %563 = vmatpush1.bf16.msra.mxu0 %v544
    %564 = vmatprep.subr.bf16.mxu0 0
    %565 = vmatpush1.bf16.msra.mxu0 %v543
    %566 = vmatprep.subr.bf16.mxu0 0
    %567 = vmatpush1.bf16.msra.mxu0 %v542
    %568 = vmatprep.subr.bf16.mxu0 0
    %569 = vmatpush1.bf16.msra.mxu0 %v541
    %570 = vmatprep.subr.bf16.mxu0 0
    %571 = vmatpush1.bf16.msra.mxu0 %v540
    %572 = vmatprep.subr.bf16.mxu0 0
    %573 = vmatpush2.bf16.msra.mxu0 0
    %574 = vmatprep.subr.bf16.mxu0 0
    %575 = vmatpush2.bf16.msra.mxu0 0
    %576 = vmatprep.subr.bf16.mxu0 0
    %577 = vmatpush2.bf16.msra.mxu0 0
    %578 = vmatprep.subr.bf16.mxu0 0
    %579 = vmatpush2.bf16.msra.mxu0 0
    %580 = vmatprep.subr.bf16.mxu0 0
    %581 = vmatpush2.bf16.msra.mxu0 0
    %582 = vmatprep.subr.bf16.mxu0 0
    %583 = vmatpush2.bf16.msra.mxu0 0
    %584 = vmatprep.subr.bf16.mxu0 0
    %585 = vmatpush2.bf16.msra.mxu0 0
    %586 = vmatprep.subr.bf16.mxu0 0
    %587 = vmatpush2.bf16.msra.mxu0 0
    %588 = vmatprep.mubr.bf16.mxu0 0
    %589 = vmatmul.mubr.bf16.gmra.mxu0 %v506
    %v590 = vpop.f32.mrf.mxu0
    %v591 = vadd.f32 0.0, %v590
    %v592 = vpop.f32.mrf.mxu0
    %v593 = vpop.f32.mrf.mxu0
    %v594 = vpop.f32.mrf.mxu0
    %595 = vdwg.mxu0
    %v596 = vadd.f32 %v484, %v591
    %v597 = vpack.c.bf16 %v596, %v596
    %598 = vst [vmem:[#allocation5] sm:$0xf] %v597
    %v599 = vrot.slane %v596, 4
    %v600 = vadd.f32 %v596, %v599
    %v601 = vrot.slane %v600, 2
    %v602 = vadd.f32 %v600, %v601
    %v603 = vrot.slane %v602, 1
    %v604 = vadd.f32 %v602, %v603
    %v605 = vadd.f32 %v604, 0.0
    %s606 = scalar_lea.vmem %s0, 8
    %v607 = vld [vmem:[%s606] sm:$0xf]
    %v608 = vld [vmem:[#allocation2] sm:$0xf]
    %v609 = vld [vmem:[#allocation2 + $0x4] sm:$0xf]
    %v610 = vld [vmem:[#allocation2 + $0x8] sm:$0xf]
    %v611 = vld [vmem:[#allocation2 + $0xc] sm:$0xf]
    %v612 = vld [vmem:[#allocation2 + $0x10] sm:$0xf]
    %v613 = vld [vmem:[#allocation2 + $0x14] sm:$0xf]
    %v614 = vld [vmem:[#allocation2 + $0x18] sm:$0xf]
    %v615 = vld [vmem:[#allocation2 + $0x1c] sm:$0xf]
    %v616 = vld [vmem:[#allocation2 + $0x20] sm:$0xf]
    %v617 = vld [vmem:[#allocation2 + $0x24] sm:$0xf]
    %v618 = vld [vmem:[#allocation2 + $0x28] sm:$0xf]
    %v619 = vld [vmem:[#allocation2 + $0x2c] sm:$0xf]
    %v620 = vld [vmem:[#allocation2 + $0x30] sm:$0xf]
    %v621 = vld [vmem:[#allocation2 + $0x34] sm:$0xf]
    %v622 = vld [vmem:[#allocation2 + $0x38] sm:$0xf]
    %v623 = vld [vmem:[#allocation2 + $0x3c] sm:$0xf]
    %v624 = vld [vmem:[%s606 + $0x4] sm:$0x1]
    %v625 = vld [vmem:[%s48] sm:$0xf]
    %v626 = vld [vmem:[%s48 + $0x4] sm:$0xf]
    %v627 = vld [vmem:[%s48 + $0x8] sm:$0xf]
    %v628 = vld [vmem:[%s48 + $0xc] sm:$0xf]
    %v629 = vld [vmem:[%s48 + $0x10] sm:$0xf]
    %v630 = vld [vmem:[%s48 + $0x14] sm:$0xf]
    %v631 = vld [vmem:[%s48 + $0x18] sm:$0xf]
    %v632 = vld [vmem:[%s48 + $0x1c] sm:$0xf]
    %v633 = vld [vmem:[%s48 + $0x20] sm:$0xf]
    %v634 = vld [vmem:[%s48 + $0x24] sm:$0xf]
    %v635 = vld [vmem:[%s48 + $0x28] sm:$0xf]
    %v636 = vld [vmem:[%s48 + $0x2c] sm:$0xf]
    %v637 = vld [vmem:[%s48 + $0x30] sm:$0xf]
    %v638 = vld [vmem:[%s48 + $0x34] sm:$0xf]
    %v639 = vld [vmem:[%s48 + $0x38] sm:$0xf]
    %v640 = vld [vmem:[%s48 + $0x3c] sm:$0xf]
    %v643 = vunpack.c.l.b16 %v607
    %v644 = vunpack.c.l.b16 %v624
    %v645 = vpack.c.b16 %v644, %v643
    %v647 = vshrl.u32 %v645, 16
    %v649 = vshll.u32 %v645, 16
    %v651 = vrot.slane %v649, 1
    %v652 = vor.u32 %v647, %v651
    %v670 = vunpack.c.l.b16 %v625
    %v671 = vunpack.c.l.b16 %v626
    %v672 = vunpack.c.l.b16 %v627
    %v673 = vunpack.c.l.b16 %v628
    %v674 = vunpack.c.l.b16 %v629
    %v675 = vunpack.c.l.b16 %v630
    %v676 = vunpack.c.l.b16 %v631
    %v677 = vunpack.c.l.b16 %v632
    %v678 = vunpack.c.l.b16 %v633
    %v679 = vunpack.c.l.b16 %v634
    %v680 = vunpack.c.l.b16 %v635
    %v681 = vunpack.c.l.b16 %v636
    %v682 = vunpack.c.l.b16 %v637
    %v683 = vunpack.c.l.b16 %v638
    %v684 = vunpack.c.l.b16 %v639
    %v685 = vunpack.c.l.b16 %v640
    %v686 = vpack.c.b16 %v671, %v670
    %v687 = vpack.c.b16 %v673, %v672
    %v688 = vpack.c.b16 %v675, %v674
    %v689 = vpack.c.b16 %v677, %v676
    %v690 = vpack.c.b16 %v679, %v678
    %v691 = vpack.c.b16 %v681, %v680
    %v692 = vpack.c.b16 %v683, %v682
    %v693 = vpack.c.b16 %v685, %v684
    %702 = vmatprep.subr.bf16.mxu0 0
    %703 = vmatpush1.bf16.msra.mxu0 %v693
    %704 = vmatprep.subr.bf16.mxu0 0
    %705 = vmatpush1.bf16.msra.mxu0 %v692
    %706 = vmatprep.subr.bf16.mxu0 0
    %707 = vmatpush1.bf16.msra.mxu0 %v691
    %708 = vmatprep.subr.bf16.mxu0 0
    %709 = vmatpush1.bf16.msra.mxu0 %v690
    %710 = vmatprep.subr.bf16.mxu0 0
    %711 = vmatpush1.bf16.msra.mxu0 %v689
    %712 = vmatprep.subr.bf16.mxu0 0
    %713 = vmatpush1.bf16.msra.mxu0 %v688
    %714 = vmatprep.subr.bf16.mxu0 0
    %715 = vmatpush1.bf16.msra.mxu0 %v687
    %716 = vmatprep.subr.bf16.mxu0 0
    %717 = vmatpush1.bf16.msra.mxu0 %v686
    %718 = vmatprep.subr.bf16.mxu0 0
    %719 = vmatpush2.bf16.msra.mxu0 0
    %720 = vmatprep.subr.bf16.mxu0 0
    %721 = vmatpush2.bf16.msra.mxu0 0
    %722 = vmatprep.subr.bf16.mxu0 0
    %723 = vmatpush2.bf16.msra.mxu0 0
    %724 = vmatprep.subr.bf16.mxu0 0
    %725 = vmatpush2.bf16.msra.mxu0 0
    %726 = vmatprep.subr.bf16.mxu0 0
    %727 = vmatpush2.bf16.msra.mxu0 0
    %728 = vmatprep.subr.bf16.mxu0 0
    %729 = vmatpush2.bf16.msra.mxu0 0
    %730 = vmatprep.subr.bf16.mxu0 0
    %731 = vmatpush2.bf16.msra.mxu0 0
    %732 = vmatprep.subr.bf16.mxu0 0
    %733 = vmatpush2.bf16.msra.mxu0 0
    %734 = vmatprep.mubr.bf16.mxu0 0
    %735 = vmatmul.mubr.bf16.gmra.mxu0 %v652
    %v736 = vpop.f32.mrf.mxu0
    %v737 = vadd.f32 0.0, %v736
    %v738 = vpop.f32.mrf.mxu0
    %v739 = vpop.f32.mrf.mxu0
    %v740 = vpop.f32.mrf.mxu0
    %741 = vdwg.mxu0
    %v758 = vunpack.c.l.b16 %v608
    %v759 = vunpack.c.l.b16 %v609
    %v760 = vunpack.c.l.b16 %v610
    %v761 = vunpack.c.l.b16 %v611
    %v762 = vunpack.c.l.b16 %v612
    %v763 = vunpack.c.l.b16 %v613
    %v764 = vunpack.c.l.b16 %v614
    %v765 = vunpack.c.l.b16 %v615
    %v766 = vunpack.c.l.b16 %v616
    %v767 = vunpack.c.l.b16 %v617
    %v768 = vunpack.c.l.b16 %v618
    %v769 = vunpack.c.l.b16 %v619
    %v770 = vunpack.c.l.b16 %v620
    %v771 = vunpack.c.l.b16 %v621
    %v772 = vunpack.c.l.b16 %v622
    %v773 = vunpack.c.l.b16 %v623
    %v774 = vpack.c.b16 %v759, %v758
    %v775 = vpack.c.b16 %v761, %v760
    %v776 = vpack.c.b16 %v763, %v762
    %v777 = vpack.c.b16 %v765, %v764
    %v778 = vpack.c.b16 %v767, %v766
    %v779 = vpack.c.b16 %v769, %v768
    %v780 = vpack.c.b16 %v771, %v770
    %v781 = vpack.c.b16 %v773, %v772
    %790 = vmatprep.subr.bf16.mxu0 0
    %791 = vmatpush1.bf16.msra.mxu0 %v781
    %792 = vmatprep.subr.bf16.mxu0 0
    %793 = vmatpush1.bf16.msra.mxu0 %v780
    %794 = vmatprep.subr.bf16.mxu0 0
    %795 = vmatpush1.bf16.msra.mxu0 %v779
    %796 = vmatprep.subr.bf16.mxu0 0
    %797 = vmatpush1.bf16.msra.mxu0 %v778
    %798 = vmatprep.subr.bf16.mxu0 0
    %799 = vmatpush1.bf16.msra.mxu0 %v777
    %800 = vmatprep.subr.bf16.mxu0 0
    %801 = vmatpush1.bf16.msra.mxu0 %v776
    %802 = vmatprep.subr.bf16.mxu0 0
    %803 = vmatpush1.bf16.msra.mxu0 %v775
    %804 = vmatprep.subr.bf16.mxu0 0
    %805 = vmatpush1.bf16.msra.mxu0 %v774
    %806 = vmatprep.subr.bf16.mxu0 0
    %807 = vmatpush2.bf16.msra.mxu0 0
    %808 = vmatprep.subr.bf16.mxu0 0
    %809 = vmatpush2.bf16.msra.mxu0 0
    %810 = vmatprep.subr.bf16.mxu0 0
    %811 = vmatpush2.bf16.msra.mxu0 0
    %812 = vmatprep.subr.bf16.mxu0 0
    %813 = vmatpush2.bf16.msra.mxu0 0
    %814 = vmatprep.subr.bf16.mxu0 0
    %815 = vmatpush2.bf16.msra.mxu0 0
    %816 = vmatprep.subr.bf16.mxu0 0
    %817 = vmatpush2.bf16.msra.mxu0 0
    %818 = vmatprep.subr.bf16.mxu0 0
    %819 = vmatpush2.bf16.msra.mxu0 0
    %820 = vmatprep.subr.bf16.mxu0 0
    %821 = vmatpush2.bf16.msra.mxu0 0
    %822 = vmatprep.mubr.bf16.mxu0 0
    %823 = vmatmul.mubr.bf16.gmra.mxu0 %v607
    %v824 = vpop.f32.mrf.mxu0
    %v825 = vadd.f32 %v737, %v824
    %v826 = vpop.f32.mrf.mxu0
    %v827 = vpop.f32.mrf.mxu0
    %v828 = vpop.f32.mrf.mxu0
    %829 = vdwg.mxu0
    %v830 = vld [vmem:[%s606] sm:$0xe]
    %v831 = vld [vmem:[%s255] sm:$0xf]
    %v832 = vld [vmem:[%s255 + $0x4] sm:$0xf]
    %v833 = vld [vmem:[%s255 + $0x8] sm:$0xf]
    %v834 = vld [vmem:[%s255 + $0xc] sm:$0xf]
    %v835 = vld [vmem:[%s255 + $0x10] sm:$0xf]
    %v836 = vld [vmem:[%s255 + $0x14] sm:$0xf]
    %v837 = vld [vmem:[%s255 + $0x18] sm:$0xf]
    %v838 = vld [vmem:[%s255 + $0x1c] sm:$0xf]
    %v839 = vld [vmem:[%s255 + $0x20] sm:$0xf]
    %v840 = vld [vmem:[%s255 + $0x24] sm:$0xf]
    %v841 = vld [vmem:[%s255 + $0x28] sm:$0xf]
    %v842 = vld [vmem:[%s255 + $0x2c] sm:$0xf]
    %v843 = vld [vmem:[%s255 + $0x30] sm:$0xf]
    %v844 = vld [vmem:[%s255 + $0x34] sm:$0xf]
    %v845 = vld [vmem:[%s255 + $0x38] sm:$0xf]
    %v846 = vld [vmem:[%s255 + $0x3c] sm:$0xf]
    %v848 = vunpack.c.l.b16 %v830
    %v849 = vpack.c.b16 %v644, %v848
    %v850 = vrot.slane %v849, 1
    %v868 = vunpack.c.l.b16 %v831
    %v869 = vunpack.c.l.b16 %v832
    %v870 = vunpack.c.l.b16 %v833
    %v871 = vunpack.c.l.b16 %v834
    %v872 = vunpack.c.l.b16 %v835
    %v873 = vunpack.c.l.b16 %v836
    %v874 = vunpack.c.l.b16 %v837
    %v875 = vunpack.c.l.b16 %v838
    %v876 = vunpack.c.l.b16 %v839
    %v877 = vunpack.c.l.b16 %v840
    %v878 = vunpack.c.l.b16 %v841
    %v879 = vunpack.c.l.b16 %v842
    %v880 = vunpack.c.l.b16 %v843
    %v881 = vunpack.c.l.b16 %v844
    %v882 = vunpack.c.l.b16 %v845
    %v883 = vunpack.c.l.b16 %v846
    %v884 = vpack.c.b16 %v869, %v868
    %v885 = vpack.c.b16 %v871, %v870
    %v886 = vpack.c.b16 %v873, %v872
    %v887 = vpack.c.b16 %v875, %v874
    %v888 = vpack.c.b16 %v877, %v876
    %v889 = vpack.c.b16 %v879, %v878
    %v890 = vpack.c.b16 %v881, %v880
    %v891 = vpack.c.b16 %v883, %v882
    %900 = vmatprep.subr.bf16.mxu0 0
    %901 = vmatpush1.bf16.msra.mxu0 %v891
    %902 = vmatprep.subr.bf16.mxu0 0
    %903 = vmatpush1.bf16.msra.mxu0 %v890
    %904 = vmatprep.subr.bf16.mxu0 0
    %905 = vmatpush1.bf16.msra.mxu0 %v889
    %906 = vmatprep.subr.bf16.mxu0 0
    %907 = vmatpush1.bf16.msra.mxu0 %v888
    %908 = vmatprep.subr.bf16.mxu0 0
    %909 = vmatpush1.bf16.msra.mxu0 %v887
    %910 = vmatprep.subr.bf16.mxu0 0
    %911 = vmatpush1.bf16.msra.mxu0 %v886
    %912 = vmatprep.subr.bf16.mxu0 0
    %913 = vmatpush1.bf16.msra.mxu0 %v885
    %914 = vmatprep.subr.bf16.mxu0 0
    %915 = vmatpush1.bf16.msra.mxu0 %v884
    %916 = vmatprep.subr.bf16.mxu0 0
    %917 = vmatpush2.bf16.msra.mxu0 0
    %918 = vmatprep.subr.bf16.mxu0 0
    %919 = vmatpush2.bf16.msra.mxu0 0
    %920 = vmatprep.subr.bf16.mxu0 0
    %921 = vmatpush2.bf16.msra.mxu0 0
    %922 = vmatprep.subr.bf16.mxu0 0
    %923 = vmatpush2.bf16.msra.mxu0 0
    %924 = vmatprep.subr.bf16.mxu0 0
    %925 = vmatpush2.bf16.msra.mxu0 0
    %926 = vmatprep.subr.bf16.mxu0 0
    %927 = vmatpush2.bf16.msra.mxu0 0
    %928 = vmatprep.subr.bf16.mxu0 0
    %929 = vmatpush2.bf16.msra.mxu0 0
    %930 = vmatprep.subr.bf16.mxu0 0
    %931 = vmatpush2.bf16.msra.mxu0 0
    %932 = vmatprep.mubr.bf16.mxu0 0
    %933 = vmatmul.mubr.bf16.gmra.mxu0 %v850
    %v934 = vpop.f32.mrf.mxu0
    %v935 = vadd.f32 0.0, %v934
    %v936 = vpop.f32.mrf.mxu0
    %v937 = vpop.f32.mrf.mxu0
    %v938 = vpop.f32.mrf.mxu0
    %939 = vdwg.mxu0
    %v940 = vadd.f32 %v825, %v935
    %v941 = vld [vmem:[%s606 + $0x4] sm:$0x3]
    %v942 = vld [vmem:[%s367] sm:$0xf]
    %v943 = vld [vmem:[%s367 + $0x4] sm:$0xf]
    %v944 = vld [vmem:[%s367 + $0x8] sm:$0xf]
    %v945 = vld [vmem:[%s367 + $0xc] sm:$0xf]
    %v946 = vld [vmem:[%s367 + $0x10] sm:$0xf]
    %v947 = vld [vmem:[%s367 + $0x14] sm:$0xf]
    %v948 = vld [vmem:[%s367 + $0x18] sm:$0xf]
    %v949 = vld [vmem:[%s367 + $0x1c] sm:$0xf]
    %v950 = vld [vmem:[%s367 + $0x20] sm:$0xf]
    %v951 = vld [vmem:[%s367 + $0x24] sm:$0xf]
    %v952 = vld [vmem:[%s367 + $0x28] sm:$0xf]
    %v953 = vld [vmem:[%s367 + $0x2c] sm:$0xf]
    %v954 = vld [vmem:[%s367 + $0x30] sm:$0xf]
    %v955 = vld [vmem:[%s367 + $0x34] sm:$0xf]
    %v956 = vld [vmem:[%s367 + $0x38] sm:$0xf]
    %v957 = vld [vmem:[%s367 + $0x3c] sm:$0xf]
    %v959 = vunpack.c.l.b16 %v941
    %v960 = vpack.c.b16 %v959, %v848
    %v962 = vshrl.u32 %v960, 16
    %v964 = vrot.slane %v962, 1
    %v965 = vshll.u32 %v960, 16
    %v967 = vrot.slane %v965, 2
    %v968 = vor.u32 %v964, %v967
    %v986 = vunpack.c.l.b16 %v942
    %v987 = vunpack.c.l.b16 %v943
    %v988 = vunpack.c.l.b16 %v944
    %v989 = vunpack.c.l.b16 %v945
    %v990 = vunpack.c.l.b16 %v946
    %v991 = vunpack.c.l.b16 %v947
    %v992 = vunpack.c.l.b16 %v948
    %v993 = vunpack.c.l.b16 %v949
    %v994 = vunpack.c.l.b16 %v950
    %v995 = vunpack.c.l.b16 %v951
    %v996 = vunpack.c.l.b16 %v952
    %v997 = vunpack.c.l.b16 %v953
    %v998 = vunpack.c.l.b16 %v954
    %v999 = vunpack.c.l.b16 %v955
    %v1000 = vunpack.c.l.b16 %v956
    %v1001 = vunpack.c.l.b16 %v957
    %v1002 = vpack.c.b16 %v987, %v986
    %v1003 = vpack.c.b16 %v989, %v988
    %v1004 = vpack.c.b16 %v991, %v990
    %v1005 = vpack.c.b16 %v993, %v992
    %v1006 = vpack.c.b16 %v995, %v994
    %v1007 = vpack.c.b16 %v997, %v996
    %v1008 = vpack.c.b16 %v999, %v998
    %v1009 = vpack.c.b16 %v1001, %v1000
    %1018 = vmatprep.subr.bf16.mxu0 0
    %1019 = vmatpush1.bf16.msra.mxu0 %v1009
    %1020 = vmatprep.subr.bf16.mxu0 0
    %1021 = vmatpush1.bf16.msra.mxu0 %v1008
    %1022 = vmatprep.subr.bf16.mxu0 0
    %1023 = vmatpush1.bf16.msra.mxu0 %v1007
    %1024 = vmatprep.subr.bf16.mxu0 0
    %1025 = vmatpush1.bf16.msra.mxu0 %v1006
    %1026 = vmatprep.subr.bf16.mxu0 0
    %1027 = vmatpush1.bf16.msra.mxu0 %v1005
    %1028 = vmatprep.subr.bf16.mxu0 0
    %1029 = vmatpush1.bf16.msra.mxu0 %v1004
    %1030 = vmatprep.subr.bf16.mxu0 0
    %1031 = vmatpush1.bf16.msra.mxu0 %v1003
    %1032 = vmatprep.subr.bf16.mxu0 0
    %1033 = vmatpush1.bf16.msra.mxu0 %v1002
    %1034 = vmatprep.subr.bf16.mxu0 0
    %1035 = vmatpush2.bf16.msra.mxu0 0
    %1036 = vmatprep.subr.bf16.mxu0 0
    %1037 = vmatpush2.bf16.msra.mxu0 0
    %1038 = vmatprep.subr.bf16.mxu0 0
    %1039 = vmatpush2.bf16.msra.mxu0 0
    %1040 = vmatprep.subr.bf16.mxu0 0
    %1041 = vmatpush2.bf16.msra.mxu0 0
    %1042 = vmatprep.subr.bf16.mxu0 0
    %1043 = vmatpush2.bf16.msra.mxu0 0
    %1044 = vmatprep.subr.bf16.mxu0 0
    %1045 = vmatpush2.bf16.msra.mxu0 0
    %1046 = vmatprep.subr.bf16.mxu0 0
    %1047 = vmatpush2.bf16.msra.mxu0 0
    %1048 = vmatprep.subr.bf16.mxu0 0
    %1049 = vmatpush2.bf16.msra.mxu0 0
    %1050 = vmatprep.mubr.bf16.mxu0 0
    %1051 = vmatmul.mubr.bf16.gmra.mxu0 %v968
    %v1052 = vpop.f32.mrf.mxu0
    %v1053 = vadd.f32 0.0, %v1052
    %v1054 = vpop.f32.mrf.mxu0
    %v1055 = vpop.f32.mrf.mxu0
    %v1056 = vpop.f32.mrf.mxu0
    %1057 = vdwg.mxu0
    %v1058 = vadd.f32 %v940, %v1053
    %v1059 = vld [vmem:[%s606] sm:$0xc]
    %v1060 = vld [vmem:[%s486] sm:$0xf]
    %v1061 = vld [vmem:[%s486 + $0x4] sm:$0xf]
    %v1062 = vld [vmem:[%s486 + $0x8] sm:$0xf]
    %v1063 = vld [vmem:[%s486 + $0xc] sm:$0xf]
    %v1064 = vld [vmem:[%s486 + $0x10] sm:$0xf]
    %v1065 = vld [vmem:[%s486 + $0x14] sm:$0xf]
    %v1066 = vld [vmem:[%s486 + $0x18] sm:$0xf]
    %v1067 = vld [vmem:[%s486 + $0x1c] sm:$0xf]
    %v1068 = vld [vmem:[%s486 + $0x20] sm:$0xf]
    %v1069 = vld [vmem:[%s486 + $0x24] sm:$0xf]
    %v1070 = vld [vmem:[%s486 + $0x28] sm:$0xf]
    %v1071 = vld [vmem:[%s486 + $0x2c] sm:$0xf]
    %v1072 = vld [vmem:[%s486 + $0x30] sm:$0xf]
    %v1073 = vld [vmem:[%s486 + $0x34] sm:$0xf]
    %v1074 = vld [vmem:[%s486 + $0x38] sm:$0xf]
    %v1075 = vld [vmem:[%s486 + $0x3c] sm:$0xf]
    %v1077 = vunpack.c.l.b16 %v1059
    %v1078 = vpack.c.b16 %v959, %v1077
    %v1079 = vrot.slane %v1078, 2
    %v1097 = vunpack.c.l.b16 %v1060
    %v1098 = vunpack.c.l.b16 %v1061
    %v1099 = vunpack.c.l.b16 %v1062
    %v1100 = vunpack.c.l.b16 %v1063
    %v1101 = vunpack.c.l.b16 %v1064
    %v1102 = vunpack.c.l.b16 %v1065
    %v1103 = vunpack.c.l.b16 %v1066
    %v1104 = vunpack.c.l.b16 %v1067
    %v1105 = vunpack.c.l.b16 %v1068
    %v1106 = vunpack.c.l.b16 %v1069
    %v1107 = vunpack.c.l.b16 %v1070
    %v1108 = vunpack.c.l.b16 %v1071
    %v1109 = vunpack.c.l.b16 %v1072
    %v1110 = vunpack.c.l.b16 %v1073
    %v1111 = vunpack.c.l.b16 %v1074
    %v1112 = vunpack.c.l.b16 %v1075
    %v1113 = vpack.c.b16 %v1098, %v1097
    %v1114 = vpack.c.b16 %v1100, %v1099
    %v1115 = vpack.c.b16 %v1102, %v1101
    %v1116 = vpack.c.b16 %v1104, %v1103
    %v1117 = vpack.c.b16 %v1106, %v1105
    %v1118 = vpack.c.b16 %v1108, %v1107
    %v1119 = vpack.c.b16 %v1110, %v1109
    %v1120 = vpack.c.b16 %v1112, %v1111
    %1129 = vmatprep.subr.bf16.mxu0 0
    %1130 = vmatpush1.bf16.msra.mxu0 %v1120
    %1131 = vmatprep.subr.bf16.mxu0 0
    %1132 = vmatpush1.bf16.msra.mxu0 %v1119
    %1133 = vmatprep.subr.bf16.mxu0 0
    %1134 = vmatpush1.bf16.msra.mxu0 %v1118
    %1135 = vmatprep.subr.bf16.mxu0 0
    %1136 = vmatpush1.bf16.msra.mxu0 %v1117
    %1137 = vmatprep.subr.bf16.mxu0 0
    %1138 = vmatpush1.bf16.msra.mxu0 %v1116
    %1139 = vmatprep.subr.bf16.mxu0 0
    %1140 = vmatpush1.bf16.msra.mxu0 %v1115
    %1141 = vmatprep.subr.bf16.mxu0 0
    %1142 = vmatpush1.bf16.msra.mxu0 %v1114
    %1143 = vmatprep.subr.bf16.mxu0 0
    %1144 = vmatpush1.bf16.msra.mxu0 %v1113
    %1145 = vmatprep.subr.bf16.mxu0 0
    %1146 = vmatpush2.bf16.msra.mxu0 0
    %1147 = vmatprep.subr.bf16.mxu0 0
    %1148 = vmatpush2.bf16.msra.mxu0 0
    %1149 = vmatprep.subr.bf16.mxu0 0
    %1150 = vmatpush2.bf16.msra.mxu0 0
    %1151 = vmatprep.subr.bf16.mxu0 0
    %1152 = vmatpush2.bf16.msra.mxu0 0
    %1153 = vmatprep.subr.bf16.mxu0 0
    %1154 = vmatpush2.bf16.msra.mxu0 0
    %1155 = vmatprep.subr.bf16.mxu0 0
    %1156 = vmatpush2.bf16.msra.mxu0 0
    %1157 = vmatprep.subr.bf16.mxu0 0
    %1158 = vmatpush2.bf16.msra.mxu0 0
    %1159 = vmatprep.subr.bf16.mxu0 0
    %1160 = vmatpush2.bf16.msra.mxu0 0
    %1161 = vmatprep.mubr.bf16.mxu0 0
    %1162 = vmatmul.mubr.bf16.gmra.mxu0 %v1079
    %v1163 = vpop.f32.mrf.mxu0
    %v1164 = vadd.f32 0.0, %v1163
    %v1165 = vpop.f32.mrf.mxu0
    %v1166 = vpop.f32.mrf.mxu0
    %v1167 = vpop.f32.mrf.mxu0
    %1168 = vdwg.mxu0
    %v1169 = vadd.f32 %v1058, %v1164
    %v1170 = vpack.c.bf16 %v1169, %v1169
    %s1171 = scalar_lea.vmem [#allocation5], 4
    %1172 = vst [vmem:[%s1171] sm:$0xf] %v1170
    %v1173 = vrot.slane %v1169, 4
    %v1174 = vadd.f32 %v1169, %v1173
    %v1175 = vrot.slane %v1174, 2
    %v1176 = vadd.f32 %v1174, %v1175
    %v1177 = vrot.slane %v1176, 1
    %v1178 = vadd.f32 %v1176, %v1177
    %v1179 = vadd.f32 %v605, %v1178
    %v1180 = vmul.f32 %v1179, 0.0625
    %v1181 = vsub.f32 %v596, %v1180
    %v1182 = vmul.f32 %v1181, %v1181
    %v1183 = vrot.slane %v1182, 4
    %v1184 = vadd.f32 %v1182, %v1183
    %v1185 = vrot.slane %v1184, 2
    %v1186 = vadd.f32 %v1184, %v1185
    %v1187 = vrot.slane %v1186, 1
    %v1188 = vadd.f32 %v1186, %v1187
    %v1189 = vadd.f32 %v1188, 0.0
    %v1190 = vsub.f32 %v1169, %v1180
    %v1191 = vmul.f32 %v1190, %v1190
    %v1192 = vrot.slane %v1191, 4
    %v1193 = vadd.f32 %v1191, %v1192
    %v1194 = vrot.slane %v1193, 2
    %v1195 = vadd.f32 %v1193, %v1194
    %v1196 = vrot.slane %v1195, 1
    %v1197 = vadd.f32 %v1195, %v1196
    %v1198 = vadd.f32 %v1189, %v1197
    %1199 = vst [vmem:[#allocation6] sm:$0x1] %v1179
    %1200 = vst [vmem:[#allocation6 + $0x1] sm:$0x1] %v1198
    // Predicated region
    $region14: #{tpu_custom_call.1} parent=1 // pred_check
      _
    $region15: #{tpu_custom_call.1} parent=1 // pred_check_branch
      %1202 = sbr.rel (0) target = $region17
    $region16: #{tpu_custom_call.1} parent=1 // pred_region
      %s1204 = ssub.s32 128, 128
      %1205 = vsyncadd [#allocation4], %s1204
      %s1206 = sshll.u32 [#allocation5], 4
      %s1207 = int_to_ptr.vmem [resolvable:$true] %s1206
      %1212 = dma.vmem_to_hbm [thread:$0]  %s1207, 128, %s2, [#allocation4], 64, 64, 4
    $region17: #{tpu_custom_call.1} parent=1 // pred_fallthru
      _
    // Predicated region
    $region18: #{tpu_custom_call.1} parent=1 // pred_check
      _
    $region19: #{tpu_custom_call.1} parent=1 // pred_check_branch
      %1214 = sbr.rel (0) target = $region21
    $region20: #{tpu_custom_call.1} parent=1 // pred_region
      %s1216 = ssub.s32 32, 32
      %1217 = vsyncadd [#allocation7], %s1216
      %s1219 = sshll.u32 [#allocation6], 4
      %s1220 = int_to_ptr.vmem [resolvable:$true] %s1219
      %1222 = dma.vmem_to_hbm [thread:$0]  %s1220, 32, %s3, [#allocation7]
    $region21: #{tpu_custom_call.1} parent=1 // pred_fallthru
      _
    // Predicated region
    $region22: #{tpu_custom_call.1} parent=1 // pred_check
      _
    $region23: #{tpu_custom_call.1} parent=1 // pred_check_branch
      %1224 = sbr.rel (0) target = $region25
    $region24: #{tpu_custom_call.1} parent=1 // pred_region
      %1225 = dma.done [#allocation4], 128
    $region25: #{tpu_custom_call.1} parent=1 // pred_fallthru
      _
    // Predicated region
    $region26: #{tpu_custom_call.1} parent=1 // pred_check
      _
    $region27: #{tpu_custom_call.1} parent=1 // pred_check_branch
      %1227 = sbr.rel (0) target = $region29
    $region28: #{tpu_custom_call.1} parent=1 // pred_region
      %1228 = dma.done [#allocation7], 32
    $region29: #{tpu_custom_call.1} parent=1 // pred_fallthru
      _
    %1229 = vsyncpa [#allocation3], 1
    %1230 = vsyncpa [#allocation4], 1
    %1231 = vsyncpa [#allocation7], 1

</llo_original>
